<compile_context>
chip_gen: v7x
topology: tpu7x:2x2x1
jax: 0.10.0
libtpu: 0.0.40
codegen_flags: <defaults>
</compile_context>

<pallas_src>
import functools

import jax
import jax.numpy as jnp
from jax.experimental import pallas as pl
from jax.experimental.pallas import tpu as pltpu

EPS_BN = 1e-4   # matches nn.BatchNorm1d(eps=0.0001)
LANES = 128     # TPU lane width


def _round_up(x, m):
    return (x + m - 1) // m * m


# ----------------------------------------------------------------------------- kernels

def _scatter_mean_kernel(idx_ref, x_ref, o_ref, acc_ref, *, tile_out):
    """Tiled scatter-mean: acc += onehot(idx_block) @ x_block on the MXU.

    x's last lane is a ones column, so counts come out of the same matmul.
    Grid = (out_tiles ["parallel"], n_tiles ["arbitrary", reduction]).
    """
    nj = pl.program_id(1)

    @pl.when(nj == 0)
    def _():
        acc_ref[...] = jnp.zeros_like(acc_ref)

    idx = idx_ref[...]                                            # (1, TN) int32, -1 = pad
    x = x_ref[...]                                                # (TN, 128) bf16
    base = pl.program_id(0) * tile_out
    rows = jax.lax.broadcasted_iota(jnp.int32, (tile_out, idx.shape[1]), 0) + base
    onehot = (rows == idx).astype(jnp.bfloat16)                   # (TO, TN), exact in bf16
    acc_ref[...] += jnp.dot(onehot, x, preferred_element_type=jnp.float32)

    @pl.when(nj == pl.num_programs(1) - 1)
    def _():
        sums = acc_ref[...]                                       # (TO, 128) f32
        counts = sums[:, LANES - 1:]                              # ones-column == bin count
        inv = pl.reciprocal(jnp.maximum(counts, 1.0), approx=False)
        o_ref[...] = sums * inv


def _bn(y, g_ref, b_ref):
    """Training-mode (batch-statistics) BatchNorm1d, per channel over rows."""
    mean = jnp.mean(y, axis=0, keepdims=True)
    var = jnp.mean((y - mean) ** 2, axis=0, keepdims=True)
    return (y - mean) * jax.lax.rsqrt(var + EPS_BN) * g_ref[...] + b_ref[...]


def _backbone_kernel(x_ref, w_in_ref,
                     g1_ref, b1_ref, w1_ref,
                     g2_ref, b2_ref, w2_ref,
                     og_ref, ob_ref, o_ref):
    """Fused: input_conv (centre tap) -> pre-norm ResidualBlock -> output BN+ReLU.

    All intermediates stay in VMEM/vregs; matmul operands in bf16, f32 accumulate.
    """
    x = x_ref[...].astype(jnp.bfloat16)
    h0 = jnp.dot(x, w_in_ref[...], preferred_element_type=jnp.float32)        # input_conv

    h = jnp.maximum(_bn(h0, g1_ref, b1_ref), 0.0)                             # BN -> ReLU
    h = jnp.dot(h.astype(jnp.bfloat16), w1_ref[...], preferred_element_type=jnp.float32)
    h = jnp.maximum(_bn(h, g2_ref, b2_ref), 0.0)                              # BN -> ReLU
    h = jnp.dot(h.astype(jnp.bfloat16), w2_ref[...], preferred_element_type=jnp.float32)
    h = h0 + h                                                                # residual

    o_ref[...] = jnp.maximum(_bn(h, og_ref, ob_ref), 0.0)                     # output_layer


def _dual_mlp_kernel(x_ref, w1_ref, b1_ref, g1_ref, be1_ref,
                     w2_ref, b2_ref, g2_ref, be2_ref,
                     w3_ref, b3_ref, o_ref):
    """mu_linear and logvar_linear heads fused via channel-concat / block-diag weights.

    out[:, 0] = mu head, out[:, 1] = logvar head.  BN is per-channel so exact.
    """
    x = x_ref[...].astype(jnp.bfloat16)
    h = jnp.dot(x, w1_ref[...], preferred_element_type=jnp.float32) + b1_ref[...]
    h = jnp.maximum(_bn(h, g1_ref, be1_ref), 0.0)
    h = jnp.dot(h.astype(jnp.bfloat16), w2_ref[...], preferred_element_type=jnp.float32) + b2_ref[...]
    h = jnp.maximum(_bn(h, g2_ref, be2_ref), 0.0)
    o_ref[...] = jnp.dot(h.astype(jnp.bfloat16), w3_ref[...],
                         preferred_element_type=jnp.float32) + b3_ref[...]


# ----------------------------------------------------------------------------- wrappers

def fused_scatter_mean(parts, idx, num_out, *, tile_out_cap=256, tile_n_cap=2048,
                       onehot_bytes_cap=512 * 1024):
    """scatter_mean of several tensors sharing one index, in a single tiled pallas_call.

    Returns the pooled (num_out, sum_of_channels) slab; caller slices per-tensor views.
    """
    cols = [p if p.ndim == 2 else p[:, None] for p in parts]
    slab = jnp.concatenate(cols, axis=1).astype(jnp.float32)       # (N, Cu)
    n, cu = slab.shape
    assert cu <= LANES - 1, "feature slab must leave one lane for the counts column"

    # lane-dense 128-wide slab; last lane = ones so counts fall out of the matmul
    slab128 = jnp.concatenate(
        [slab, jnp.zeros((n, LANES - 1 - cu), jnp.float32), jnp.ones((n, 1), jnp.float32)],
        axis=1)

    tile_out = min(_round_up(num_out, 8), tile_out_cap)
    m_pad = _round_up(num_out, tile_out)

    # bound the per-block (tile_out x tile_n) bf16 one-hot so it stays VMEM/vreg friendly
    onehot_budget = max(LANES, (onehot_bytes_cap // (tile_out * 2)) // LANES * LANES)
    tile_n = min(_round_up(n, LANES), tile_n_cap, onehot_budget)
    n_pad = _round_up(n, tile_n)

    # padded rows get idx = -1 -> never match any bin (dropped, like torch_scatter)
    slab_p = jnp.zeros((n_pad, LANES), jnp.bfloat16).at[:n].set(slab128.astype(jnp.bfloat16))
    idx_p = jnp.full((1, n_pad), -1, jnp.int32).at[0, :n].set(idx.astype(jnp.int32))

    out = pl.pallas_call(
        functools.partial(_scatter_mean_kernel, tile_out=tile_out),
        out_shape=jax.ShapeDtypeStruct((m_pad, LANES), jnp.float32),
        grid_spec=pltpu.PrefetchScalarGridSpec(
            num_scalar_prefetch=0,
            grid=(m_pad // tile_out, n_pad // tile_n),
            in_specs=[pl.BlockSpec((1, tile_n), lambda i, j: (0, j)),
                      pl.BlockSpec((tile_n, LANES), lambda i, j: (j, 0))],
            out_specs=pl.BlockSpec((tile_out, LANES), lambda i, j: (i, 0)),
            scratch_shapes=[pltpu.VMEM((tile_out, LANES), jnp.float32)]),
        compiler_params=pltpu.CompilerParams(
            dimension_semantics=("parallel", "arbitrary"),
            vmem_limit_bytes=32 * 1024 * 1024),
    )(idx_p, slab_p)
    return out[:num_out, :cu]


def backbone(voxel_feats, params):
    """input_conv -> ResidualBlock -> output_layer as one fused kernel on (num_voxels, media)."""
    nv = voxel_feats.shape[0]
    media = params["input_conv_w"].shape[1]
    bf = lambda w: w.astype(jnp.bfloat16)
    row = lambda v: v.reshape(1, -1)
    # TODO(synk): for very large voxel counts, row-tile with a two-pass (sum/sumsq) BN so
    # batch statistics stay exact; single-block is exact and VMEM-safe at these sizes.
    return pl.pallas_call(
        _backbone_kernel,
        out_shape=jax.ShapeDtypeStruct((nv, media), jnp.float32),
    )(voxel_feats,
      bf(params["input_conv_w"]),
      row(params["res"]["g1"]), row(params["res"]["beta1"]), bf(params["res"]["w1"]),
      row(params["res"]["g2"]), row(params["res"]["beta2"]), bf(params["res"]["w2"]),
      row(params["out_g"]), row(params["out_beta"]))


def dual_head_mlp(sp_feats, p_mu, p_lv):
    """mu_linear + logvar_linear (both MLP(media,1,num_layers=3)) fused into one kernel."""
    n, media = sp_feats.shape
    cat = lambda a, b: jnp.concatenate([a, b])

    w1c = jnp.concatenate([p_mu["w1"], p_lv["w1"]], axis=1)                    # (m, 2m)
    w2c = jnp.zeros((2 * media, 2 * media), jnp.float32)
    w2c = w2c.at[:media, :media].set(p_mu["w2"]).at[media:, media:].set(p_lv["w2"])
    w3c = jnp.zeros((2 * media, 2), jnp.float32)
    w3c = w3c.at[:media, 0].set(p_mu["w3"][:, 0]).at[media:, 1].set(p_lv["w3"][:, 0])

    row = lambda v: v.reshape(1, -1)
    return pl.pallas_call(
        _dual_mlp_kernel,
        out_shape=jax.ShapeDtypeStruct((n, 2), jnp.float32),
    )(sp_feats,
      w1c.astype(jnp.bfloat16), row(cat(p_mu["b1"], p_lv["b1"])),
      row(cat(p_mu["g1"], p_lv["g1"])), row(cat(p_mu["beta1"], p_lv["beta1"])),
      w2c.astype(jnp.bfloat16), row(cat(p_mu["b2"], p_lv["b2"])),
      row(cat(p_mu["g2"], p_lv["g2"])), row(cat(p_mu["beta2"], p_lv["beta2"])),
      w3c.astype(jnp.bfloat16), row(cat(p_mu["b3"], p_lv["b3"])))


# ----------------------------------------------------------------------------- params

def init_params(key, input_channel=6, media=32):
    ks = jax.random.split(key, 12)

    def lin(k, cin, cout, scale=0.1):
        return scale * jax.random.normal(k, (cin, cout), jnp.float32)

    def mlp_params(k, c):
        k1, k2, k3 = jax.random.split(k, 3)
        return dict(
            w1=lin(k1, c, c), b1=jnp.zeros((c,), jnp.float32),
            g1=jnp.ones((c,), jnp.float32), beta1=jnp.zeros((c,), jnp.float32),
            w2=lin(k2, c, c), b2=jnp.zeros((c,), jnp.float32),
            g2=jnp.ones((c,), jnp.float32), beta2=jnp.zeros((c,), jnp.float32),
            w3=lin(k3, c, 1), b3=jnp.zeros((1,), jnp.float32),
        )

    return dict(
        input_conv_w=lin(ks[0], input_channel, media),        # SubMConv3d centre tap, bias=False
        res=dict(
            g1=jnp.ones((media,), jnp.float32), beta1=jnp.zeros((media,), jnp.float32),
            w1=lin(ks[1], media, media),
            g2=jnp.ones((media,), jnp.float32), beta2=jnp.zeros((media,), jnp.float32),
            w2=lin(ks[2], media, media),
        ),
        out_g=jnp.ones((media,), jnp.float32),
        out_beta=jnp.zeros((media,), jnp.float32),
        mu=mlp_params(ks[3], media),
        logvar=mlp_params(ks[4], media),
        pooling=mlp_params(ks[5], media),   # pooling_linear exists in the module, unused in loss()
    )


# ----------------------------------------------------------------------------- forward

def spformer_forward(params, feats, coords_float, p2v_idx, superpoints,
                     prob_labels, mu_labels, var_labels,
                     *, num_voxels, num_superpoints):
    cin = feats.shape[1]
    media = params["input_conv_w"].shape[1]

    # --- pointgroup_ops.voxelization: ONE fused scatter-mean over the p2v index ---
    vox = fused_scatter_mean([feats, coords_float], p2v_idx, num_voxels)
    voxel_feats = vox[:, :cin]                       # (nv, 6)
    voxel_coords_float = vox[:, cin:cin + 3]         # (nv, 3)
    voxel_rgb_feats = voxel_feats[:, :3]

    # --- extract_feat backbone: input_conv -> unet (ResidualBlock stand-in) -> output_layer ---
    # TODO(synk): full UBlock encoder/decoder with strided sparse conv / deconv stages and
    #             true 3x3x3 submanifold neighbourhood gather (centre tap only here).
    x = backbone(voxel_feats, params)                # (nv, media)

    # --- devoxelize: one gather of the concatenated voxel slab back to points ---
    voxel_slab = jnp.concatenate([x, voxel_coords_float, voxel_rgb_feats], axis=1)
    pts_from_vox = voxel_slab[p2v_idx]               # (N, media + 6), single XLA gather

    # --- superpoint mean pooling: ONE fused, lane-dense scatter-mean for all tensors ---
    sp = fused_scatter_mean(
        [pts_from_vox, prob_labels, mu_labels, var_labels, coords_float],
        superpoints, num_superpoints)
    o = 0
    sp_feats = sp[:, o:o + media]; o += media
    sp_coords = sp[:, o:o + 3]; o += 3
    sp_rgb_feats = sp[:, o:o + 3]; o += 3
    sp_prob_labels = sp[:, o]; o += 1
    sp_mu_labels = sp[:, o]; o += 1
    sp_var_labels = sp[:, o]; o += 1
    sp_coords_float = sp[:, o:o + 3]

    # --- per-superpoint regression heads (mu_linear + logvar_linear fused) ---
    heads = dual_head_mlp(sp_feats, params["mu"], params["logvar"])
    sp_mu_preds = heads[:, 0]
    sp_logvar_preds = heads[:, 1]

    # TODO(synk): QueryDecoder (transformer cross-attention) and Criterion (Hungarian
    # matching loss) — configs are external (decoder=None / criterion=None), and the NMS in
    # predict_by_feat is a data-dependent Python loop with no clean Pallas mapping.
    return dict(
        sp_feats=sp_feats,
        sp_coords=sp_coords,
        sp_rgb_feats=sp_rgb_feats,
        sp_coords_float=sp_coords_float,
        sp_prob_labels=sp_prob_labels,
        sp_mu_labels=sp_mu_labels,
        sp_var_labels=sp_var_labels,
        sp_mu_preds=sp_mu_preds,
        sp_logvar_preds=sp_logvar_preds,
        loss_consistency=jnp.float32(0.0),
    )


# ----------------------------------------------------------------------------- main

if __name__ == "__main__":
    key = jax.random.PRNGKey(0)
    k_par, k_feat, k_coord, k_p2v, k_sp, k_prob, k_mu, k_var = jax.random.split(key, 8)

    NUM_POINTS = 256
    NUM_VOXELS = 64
    NUM_SUPERPOINTS = 16
    INPUT_CHANNEL = 6
    MEDIA = 32

    params = init_params(k_par, input_channel=INPUT_CHANNEL, media=MEDIA)

    feats = jax.random.normal(k_feat, (NUM_POINTS, INPUT_CHANNEL), jnp.float32)
    coords_float = jax.random.uniform(k_coord, (NUM_POINTS, 3), jnp.float32)
    p2v_idx = jax.random.randint(k_p2v, (NUM_POINTS,), 0, NUM_VOXELS, jnp.int32)
    superpoints = jax.random.randint(k_sp, (NUM_POINTS,), 0, NUM_SUPERPOINTS, jnp.int32)
    prob_labels = jax.random.uniform(k_prob, (NUM_POINTS,), jnp.float32)
    mu_labels = jax.random.normal(k_mu, (NUM_POINTS,), jnp.float32)
    var_labels = jax.random.uniform(k_var, (NUM_POINTS,), jnp.float32)

    fwd = jax.jit(functools.partial(spformer_forward,
                                    num_voxels=NUM_VOXELS,
                                    num_superpoints=NUM_SUPERPOINTS))
    out = fwd(params, feats, coords_float, p2v_idx, superpoints,
              prob_labels, mu_labels, var_labels)
    jax.block_until_ready(out)

    assert out["sp_feats"].shape == (NUM_SUPERPOINTS, MEDIA)
    assert out["sp_mu_preds"].shape == (NUM_SUPERPOINTS,)
    assert out["sp_logvar_preds"].shape == (NUM_SUPERPOINTS,)
    assert out["sp_coords"].shape == (NUM_SUPERPOINTS, 3)
    assert out["sp_rgb_feats"].shape == (NUM_SUPERPOINTS, 3)
    assert out["sp_coords_float"].shape == (NUM_SUPERPOINTS, 3)
    print("KERNEL_OK")
</pallas_src>

<mosaic_0001>
module attributes {stable_mosaic.version = 11 : i64} {
  func.func @_scatter_mean_kernel(%arg0: i32, %arg1: i32, %arg2: memref<1x256xi32, #tpu.memory_space<vmem>>, %arg3: memref<256x128xbf16, #tpu.memory_space<vmem>>, %arg4: memref<64x128xf32, #tpu.memory_space<vmem>>, %arg5: memref<64x128xf32, #tpu.memory_space<vmem>>) attributes {dimension_semantics = [#tpu.dimension_semantics<parallel>, #tpu.dimension_semantics<arbitrary>], iteration_bounds = array<i64: 1, 1>, scalar_prefetch = 0 : i64, scratch_operands = 1 : i64, tpu.core_type = #tpu.core_type<tc>, window_params = [{transform_indices = @transform_0, window_bounds = array<i64: 1, 256>}, {transform_indices = @transform_1, window_bounds = array<i64: 256, 128>}, {transform_indices = @transform_2, window_bounds = array<i64: 64, 128>}]} {
    %c0_i32 = arith.constant 0 : i32
    %0 = arith.cmpi eq, %arg1, %c0_i32 : i32
    %1 = arith.extui %0 : i1 to i32
    %c0_i32_0 = arith.constant 0 : i32
    %2 = arith.cmpi ne, %1, %c0_i32_0 : i32
    scf.if %2 {
      %cst_10 = arith.constant 0.000000e+00 : f32
      %21 = vector.broadcast %cst_10 : f32 to vector<64x128xf32>
      %c0_11 = arith.constant 0 : index
      %c0_12 = arith.constant 0 : index
      %22 = vector.load %arg5[%c0_11, %c0_12] : memref<64x128xf32, #tpu.memory_space<vmem>>, vector<64x128xf32>
      tpu.vector_store %arg5[%c0_11, %c0_12], %21 {strides = array<i32>} : memref<64x128xf32, #tpu.memory_space<vmem>>, vector<64x128xf32>,
    } else {
    }
    %c0 = arith.constant 0 : index
    %c0_1 = arith.constant 0 : index
    %3 = vector.load %arg2[%c0, %c0_1] : memref<1x256xi32, #tpu.memory_space<vmem>>, vector<1x256xi32>
    %c0_2 = arith.constant 0 : index
    %c0_3 = arith.constant 0 : index
    %4 = vector.load %arg3[%c0_2, %c0_3] : memref<256x128xbf16, #tpu.memory_space<vmem>>, vector<256x128xbf16>
    %c64_i32 = arith.constant 64 : i32
    %5 = arith.muli %arg0, %c64_i32 : i32
    %6 = tpu.iota {dimensions = array<i32: 0>} : vector<64x256xi32>
    %7 = vector.broadcast %5 : i32 to vector<64x256xi32>
    %8 = arith.addi %6, %7 : vector<64x256xi32>
    %9 = vector.broadcast %3 : vector<1x256xi32> to vector<64x256xi32>
    %10 = arith.cmpi eq, %8, %9 : vector<64x256xi32>
    %11 = arith.extui %10 : vector<64x256xi1> to vector<64x256xi32>
    %12 = arith.sitofp %11 : vector<64x256xi32> to vector<64x256xf32>
    %13 = arith.truncf %12 : vector<64x256xf32> to vector<64x256xbf16>
    %c0_4 = arith.constant 0 : index
    %c0_5 = arith.constant 0 : index
    %14 = vector.load %arg5[%c0_4, %c0_5] : memref<64x128xf32, #tpu.memory_space<vmem>>, vector<64x128xf32>
    %cst = arith.constant dense<0.000000e+00> : vector<64x128xf32>
    %15 = tpu.matmul %13, %4, %cst {dimension_numbers = #tpu.dot_dimension_numbers<[1], [0], [0], [1], [0, 0, 1, 1], [], []>} : vector<64x256xbf16>, vector<256x128xbf16>, vector<64x128xf32> -> vector<64x128xf32>
    %16 = arith.addf %14, %15 : vector<64x128xf32>
    %c0_6 = arith.constant 0 : index
    %c0_7 = arith.constant 0 : index
    %17 = vector.load %arg5[%c0_6, %c0_7] : memref<64x128xf32, #tpu.memory_space<vmem>>, vector<64x128xf32>
    tpu.vector_store %arg5[%c0_6, %c0_7], %16 {strides = array<i32>} : memref<64x128xf32, #tpu.memory_space<vmem>>, vector<64x128xf32>,
    %c0_i32_8 = arith.constant 0 : i32
    %18 = arith.cmpi eq, %arg1, %c0_i32_8 : i32
    %19 = arith.extui %18 : i1 to i32
    %c0_i32_9 = arith.constant 0 : i32
    %20 = arith.cmpi ne, %19, %c0_i32_9 : i32
    scf.if %20 {
      %c0_10 = arith.constant 0 : index
      %c0_11 = arith.constant 0 : index
      %21 = vector.load %arg5[%c0_10, %c0_11] : memref<64x128xf32, #tpu.memory_space<vmem>>, vector<64x128xf32>
      %22 = vector.extract_strided_slice %21 {offsets = [0, 127], sizes = [64, 1], strides = [1, 1]} : vector<64x128xf32> to vector<64x1xf32>
      %cst_12 = arith.constant 1.000000e+00 : f32
      %23 = vector.broadcast %cst_12 : f32 to vector<64x1xf32>
      %24 = arith.maximumf %22, %23 : vector<64x1xf32>
      %25 = tpu.reciprocal %24 : vector<64x1xf32> -> vector<64x1xf32>
      %26 = vector.broadcast %25 : vector<64x1xf32> to vector<64x128xf32>
      %27 = arith.mulf %21, %26 : vector<64x128xf32>
      %c0_13 = arith.constant 0 : index
      %c0_14 = arith.constant 0 : index
      %28 = vector.load %arg4[%c0_13, %c0_14] : memref<64x128xf32, #tpu.memory_space<vmem>>, vector<64x128xf32>
      tpu.vector_store %arg4[%c0_13, %c0_14], %27 {strides = array<i32>} : memref<64x128xf32, #tpu.memory_space<vmem>>, vector<64x128xf32>,
    } else {
    }
    return
  }
  func.func @transform_0(%arg0: i32, %arg1: i32) -> (i32, i32) {
    %c0_i32 = arith.constant 0 : i32
    %c0_i32_0 = arith.constant 0 : i32
    return %c0_i32, %arg1 : i32, i32
  }
  func.func @transform_1(%arg0: i32, %arg1: i32) -> (i32, i32) {
    %c0_i32 = arith.constant 0 : i32
    %c0_i32_0 = arith.constant 0 : i32
    return %arg1, %c0_i32 : i32, i32
  }
  func.func @transform_2(%arg0: i32, %arg1: i32) -> (i32, i32) {
    %c0_i32 = arith.constant 0 : i32
    %c0_i32_0 = arith.constant 0 : i32
    return %arg0, %c0_i32 : i32, i32
  }
}

module attributes {stable_mosaic.version = 11 : i64} {
  func.func @_backbone_kernel(%arg0: memref<64x6xf32, #tpu.memory_space<vmem>>, %arg1: memref<6x32xbf16, #tpu.memory_space<vmem>>, %arg2: memref<1x32xf32, #tpu.memory_space<vmem>>, %arg3: memref<1x32xf32, #tpu.memory_space<vmem>>, %arg4: memref<32x32xbf16, #tpu.memory_space<vmem>>, %arg5: memref<1x32xf32, #tpu.memory_space<vmem>>, %arg6: memref<1x32xf32, #tpu.memory_space<vmem>>, %arg7: memref<32x32xbf16, #tpu.memory_space<vmem>>, %arg8: memref<1x32xf32, #tpu.memory_space<vmem>>, %arg9: memref<1x32xf32, #tpu.memory_space<vmem>>, %arg10: memref<64x32xf32, #tpu.memory_space<vmem>>) attributes {dimension_semantics = [], scalar_prefetch = 0 : i64, scratch_operands = 0 : i64, tpu.core_type = #tpu.core_type<tc>} {
    %c0 = arith.constant 0 : index
    %c0_0 = arith.constant 0 : index
    %0 = vector.load %arg0[%c0, %c0_0] : memref<64x6xf32, #tpu.memory_space<vmem>>, vector<64x6xf32>
    %1 = arith.truncf %0 : vector<64x6xf32> to vector<64x6xbf16>
    %c0_1 = arith.constant 0 : index
    %c0_2 = arith.constant 0 : index
    %2 = vector.load %arg1[%c0_1, %c0_2] : memref<6x32xbf16, #tpu.memory_space<vmem>>, vector<6x32xbf16>
    %cst = arith.constant dense<0.000000e+00> : vector<64x32xf32>
    %3 = tpu.matmul %1, %2, %cst {dimension_numbers = #tpu.dot_dimension_numbers<[1], [0], [0], [1], [0, 0, 1, 1], [], []>} : vector<64x6xbf16>, vector<6x32xbf16>, vector<64x32xf32> -> vector<64x32xf32>
    %cst_3 = arith.constant dense<0.000000e+00> : vector<32xf32>
    %4 = vector.multi_reduction <add>, %3, %cst_3 [0] : vector<64x32xf32> to vector<32xf32>
    %5 = vector.shape_cast %4 : vector<32xf32> to vector<1x32xf32>
    %cst_4 = arith.constant 6.400000e+01 : f32
    %6 = vector.broadcast %cst_4 : f32 to vector<1x32xf32>
    %7 = arith.divf %5, %6 : vector<1x32xf32>
    %8 = vector.broadcast %7 : vector<1x32xf32> to vector<64x32xf32>
    %9 = arith.subf %3, %8 : vector<64x32xf32>
    %10 = arith.mulf %9, %9 : vector<64x32xf32>
    %cst_5 = arith.constant dense<0.000000e+00> : vector<32xf32>
    %11 = vector.multi_reduction <add>, %10, %cst_5 [0] : vector<64x32xf32> to vector<32xf32>
    %12 = vector.shape_cast %11 : vector<32xf32> to vector<1x32xf32>
    %cst_6 = arith.constant 6.400000e+01 : f32
    %13 = vector.broadcast %cst_6 : f32 to vector<1x32xf32>
    %14 = arith.divf %12, %13 : vector<1x32xf32>
    %15 = vector.broadcast %7 : vector<1x32xf32> to vector<64x32xf32>
    %16 = arith.subf %3, %15 : vector<64x32xf32>
    %cst_7 = arith.constant 9.99999974E-5 : f32
    %17 = vector.broadcast %cst_7 : f32 to vector<1x32xf32>
    %18 = arith.addf %14, %17 : vector<1x32xf32>
    %19 = math.rsqrt %18 : vector<1x32xf32>
    %20 = vector.broadcast %19 : vector<1x32xf32> to vector<64x32xf32>
    %21 = arith.mulf %16, %20 : vector<64x32xf32>
    %c0_8 = arith.constant 0 : index
    %c0_9 = arith.constant 0 : index
    %22 = vector.load %arg2[%c0_8, %c0_9] : memref<1x32xf32, #tpu.memory_space<vmem>>, vector<1x32xf32>
    %23 = vector.broadcast %22 : vector<1x32xf32> to vector<64x32xf32>
    %24 = arith.mulf %21, %23 : vector<64x32xf32>
    %c0_10 = arith.constant 0 : index
    %c0_11 = arith.constant 0 : index
    %25 = vector.load %arg3[%c0_10, %c0_11] : memref<1x32xf32, #tpu.memory_space<vmem>>, vector<1x32xf32>
    %26 = vector.broadcast %25 : vector<1x32xf32> to vector<64x32xf32>
    %27 = arith.addf %24, %26 : vector<64x32xf32>
    %cst_12 = arith.constant 0.000000e+00 : f32
    %28 = vector.broadcast %cst_12 : f32 to vector<64x32xf32>
    %29 = arith.maximumf %27, %28 : vector<64x32xf32>
    %30 = arith.truncf %29 : vector<64x32xf32> to vector<64x32xbf16>
    %c0_13 = arith.constant 0 : index
    %c0_14 = arith.constant 0 : index
    %31 = vector.load %arg4[%c0_13, %c0_14] : memref<32x32xbf16, #tpu.memory_space<vmem>>, vector<32x32xbf16>
    %cst_15 = arith.constant dense<0.000000e+00> : vector<64x32xf32>
    %32 = tpu.matmul %30, %31, %cst_15 {dimension_numbers = #tpu.dot_dimension_numbers<[1], [0], [0], [1], [0, 0, 1, 1], [], []>} : vector<64x32xbf16>, vector<32x32xbf16>, vector<64x32xf32> -> vector<64x32xf32>
    %cst_16 = arith.constant dense<0.000000e+00> : vector<32xf32>
    %33 = vector.multi_reduction <add>, %32, %cst_16 [0] : vector<64x32xf32> to vector<32xf32>
    %34 = vector.shape_cast %33 : vector<32xf32> to vector<1x32xf32>
    %cst_17 = arith.constant 6.400000e+01 : f32
    %35 = vector.broadcast %cst_17 : f32 to vector<1x32xf32>
    %36 = arith.divf %34, %35 : vector<1x32xf32>
    %37 = vector.broadcast %36 : vector<1x32xf32> to vector<64x32xf32>
    %38 = arith.subf %32, %37 : vector<64x32xf32>
    %39 = arith.mulf %38, %38 : vector<64x32xf32>
    %cst_18 = arith.constant dense<0.000000e+00> : vector<32xf32>
    %40 = vector.multi_reduction <add>, %39, %cst_18 [0] : vector<64x32xf32> to vector<32xf32>
    %41 = vector.shape_cast %40 : vector<32xf32> to vector<1x32xf32>
    %cst_19 = arith.constant 6.400000e+01 : f32
    %42 = vector.broadcast %cst_19 : f32 to vector<1x32xf32>
    %43 = arith.divf %41, %42 : vector<1x32xf32>
    %44 = vector.broadcast %36 : vector<1x32xf32> to vector<64x32xf32>
    %45 = arith.subf %32, %44 : vector<64x32xf32>
    %cst_20 = arith.constant 9.99999974E-5 : f32
    %46 = vector.broadcast %cst_20 : f32 to vector<1x32xf32>
    %47 = arith.addf %43, %46 : vector<1x32xf32>
    %48 = math.rsqrt %47 : vector<1x32xf32>
    %49 = vector.broadcast %48 : vector<1x32xf32> to vector<64x32xf32>
    %50 = arith.mulf %45, %49 : vector<64x32xf32>
    %c0_21 = arith.constant 0 : index
    %c0_22 = arith.constant 0 : index
    %51 = vector.load %arg5[%c0_21, %c0_22] : memref<1x32xf32, #tpu.memory_space<vmem>>, vector<1x32xf32>
    %52 = vector.broadcast %51 : vector<1x32xf32> to vector<64x32xf32>
    %53 = arith.mulf %50, %52 : vector<64x32xf32>
    %c0_23 = arith.constant 0 : index
    %c0_24 = arith.constant 0 : index
    %54 = vector.load %arg6[%c0_23, %c0_24] : memref<1x32xf32, #tpu.memory_space<vmem>>, vector<1x32xf32>
    %55 = vector.broadcast %54 : vector<1x32xf32> to vector<64x32xf32>
    %56 = arith.addf %53, %55 : vector<64x32xf32>
    %cst_25 = arith.constant 0.000000e+00 : f32
    %57 = vector.broadcast %cst_25 : f32 to vector<64x32xf32>
    %58 = arith.maximumf %56, %57 : vector<64x32xf32>
    %59 = arith.truncf %58 : vector<64x32xf32> to vector<64x32xbf16>
    %c0_26 = arith.constant 0 : index
    %c0_27 = arith.constant 0 : index
    %60 = vector.load %arg7[%c0_26, %c0_27] : memref<32x32xbf16, #tpu.memory_space<vmem>>, vector<32x32xbf16>
    %cst_28 = arith.constant dense<0.000000e+00> : vector<64x32xf32>
    %61 = tpu.matmul %59, %60, %cst_28 {dimension_numbers = #tpu.dot_dimension_numbers<[1], [0], [0], [1], [0, 0, 1, 1], [], []>} : vector<64x32xbf16>, vector<32x32xbf16>, vector<64x32xf32> -> vector<64x32xf32>
    %62 = arith.addf %3, %61 : vector<64x32xf32>
    %cst_29 = arith.constant dense<0.000000e+00> : vector<32xf32>
    %63 = vector.multi_reduction <add>, %62, %cst_29 [0] : vector<64x32xf32> to vector<32xf32>
    %64 = vector.shape_cast %63 : vector<32xf32> to vector<1x32xf32>
    %cst_30 = arith.constant 6.400000e+01 : f32
    %65 = vector.broadcast %cst_30 : f32 to vector<1x32xf32>
    %66 = arith.divf %64, %65 : vector<1x32xf32>
    %67 = vector.broadcast %66 : vector<1x32xf32> to vector<64x32xf32>
    %68 = arith.subf %62, %67 : vector<64x32xf32>
    %69 = arith.mulf %68, %68 : vector<64x32xf32>
    %cst_31 = arith.constant dense<0.000000e+00> : vector<32xf32>
    %70 = vector.multi_reduction <add>, %69, %cst_31 [0] : vector<64x32xf32> to vector<32xf32>
    %71 = vector.shape_cast %70 : vector<32xf32> to vector<1x32xf32>
    %cst_32 = arith.constant 6.400000e+01 : f32
    %72 = vector.broadcast %cst_32 : f32 to vector<1x32xf32>
    %73 = arith.divf %71, %72 : vector<1x32xf32>
    %74 = vector.broadcast %66 : vector<1x32xf32> to vector<64x32xf32>
    %75 = arith.subf %62, %74 : vector<64x32xf32>
    %cst_33 = arith.constant 9.99999974E-5 : f32
    %76 = vector.broadcast %cst_33 : f32 to vector<1x32xf32>
    %77 = arith.addf %73, %76 : vector<1x32xf32>
    %78 = math.rsqrt %77 : vector<1x32xf32>
    %79 = vector.broadcast %78 : vector<1x32xf32> to vector<64x32xf32>
    %80 = arith.mulf %75, %79 : vector<64x32xf32>
    %c0_34 = arith.constant 0 : index
    %c0_35 = arith.constant 0 : index
    %81 = vector.load %arg8[%c0_34, %c0_35] : memref<1x32xf32, #tpu.memory_space<vmem>>, vector<1x32xf32>
    %82 = vector.broadcast %81 : vector<1x32xf32> to vector<64x32xf32>
    %83 = arith.mulf %80, %82 : vector<64x32xf32>
    %c0_36 = arith.constant 0 : index
    %c0_37 = arith.constant 0 : index
    %84 = vector.load %arg9[%c0_36, %c0_37] : memref<1x32xf32, #tpu.memory_space<vmem>>, vector<1x32xf32>
    %85 = vector.broadcast %84 : vector<1x32xf32> to vector<64x32xf32>
    %86 = arith.addf %83, %85 : vector<64x32xf32>
    %cst_38 = arith.constant 0.000000e+00 : f32
    %87 = vector.broadcast %cst_38 : f32 to vector<64x32xf32>
    %88 = arith.maximumf %86, %87 : vector<64x32xf32>
    %c0_39 = arith.constant 0 : index
    %c0_40 = arith.constant 0 : index
    %89 = vector.load %arg10[%c0_39, %c0_40] : memref<64x32xf32, #tpu.memory_space<vmem>>, vector<64x32xf32>
    tpu.vector_store %arg10[%c0_39, %c0_40], %88 {strides = array<i32>} : memref<64x32xf32, #tpu.memory_space<vmem>>, vector<64x32xf32>,
    return
  }
}

module attributes {stable_mosaic.version = 11 : i64} {
  func.func @_scatter_mean_kernel(%arg0: i32, %arg1: i32, %arg2: memref<1x256xi32, #tpu.memory_space<vmem>>, %arg3: memref<256x128xbf16, #tpu.memory_space<vmem>>, %arg4: memref<16x128xf32, #tpu.memory_space<vmem>>, %arg5: memref<16x128xf32, #tpu.memory_space<vmem>>) attributes {dimension_semantics = [#tpu.dimension_semantics<parallel>, #tpu.dimension_semantics<arbitrary>], iteration_bounds = array<i64: 1, 1>, scalar_prefetch = 0 : i64, scratch_operands = 1 : i64, tpu.core_type = #tpu.core_type<tc>, window_params = [{transform_indices = @transform_0, window_bounds = array<i64: 1, 256>}, {transform_indices = @transform_1, window_bounds = array<i64: 256, 128>}, {transform_indices = @transform_2, window_bounds = array<i64: 16, 128>}]} {
    %c0_i32 = arith.constant 0 : i32
    %0 = arith.cmpi eq, %arg1, %c0_i32 : i32
    %1 = arith.extui %0 : i1 to i32
    %c0_i32_0 = arith.constant 0 : i32
    %2 = arith.cmpi ne, %1, %c0_i32_0 : i32
    scf.if %2 {
      %cst_10 = arith.constant 0.000000e+00 : f32
      %21 = vector.broadcast %cst_10 : f32 to vector<16x128xf32>
      %c0_11 = arith.constant 0 : index
      %c0_12 = arith.constant 0 : index
      %22 = vector.load %arg5[%c0_11, %c0_12] : memref<16x128xf32, #tpu.memory_space<vmem>>, vector<16x128xf32>
      tpu.vector_store %arg5[%c0_11, %c0_12], %21 {strides = array<i32>} : memref<16x128xf32, #tpu.memory_space<vmem>>, vector<16x128xf32>,
    } else {
    }
    %c0 = arith.constant 0 : index
    %c0_1 = arith.constant 0 : index
    %3 = vector.load %arg2[%c0, %c0_1] : memref<1x256xi32, #tpu.memory_space<vmem>>, vector<1x256xi32>
    %c0_2 = arith.constant 0 : index
    %c0_3 = arith.constant 0 : index
    %4 = vector.load %arg3[%c0_2, %c0_3] : memref<256x128xbf16, #tpu.memory_space<vmem>>, vector<256x128xbf16>
    %c16_i32 = arith.constant 16 : i32
    %5 = arith.muli %arg0, %c16_i32 : i32
    %6 = tpu.iota {dimensions = array<i32: 0>} : vector<16x256xi32>
    %7 = vector.broadcast %5 : i32 to vector<16x256xi32>
    %8 = arith.addi %6, %7 : vector<16x256xi32>
    %9 = vector.broadcast %3 : vector<1x256xi32> to vector<16x256xi32>
    %10 = arith.cmpi eq, %8, %9 : vector<16x256xi32>
    %11 = arith.extui %10 : vector<16x256xi1> to vector<16x256xi32>
    %12 = arith.sitofp %11 : vector<16x256xi32> to vector<16x256xf32>
    %13 = arith.truncf %12 : vector<16x256xf32> to vector<16x256xbf16>
    %c0_4 = arith.constant 0 : index
    %c0_5 = arith.constant 0 : index
    %14 = vector.load %arg5[%c0_4, %c0_5] : memref<16x128xf32, #tpu.memory_space<vmem>>, vector<16x128xf32>
    %cst = arith.constant dense<0.000000e+00> : vector<16x128xf32>
    %15 = tpu.matmul %13, %4, %cst {dimension_numbers = #tpu.dot_dimension_numbers<[1], [0], [0], [1], [0, 0, 1, 1], [], []>} : vector<16x256xbf16>, vector<256x128xbf16>, vector<16x128xf32> -> vector<16x128xf32>
    %16 = arith.addf %14, %15 : vector<16x128xf32>
    %c0_6 = arith.constant 0 : index
    %c0_7 = arith.constant 0 : index
    %17 = vector.load %arg5[%c0_6, %c0_7] : memref<16x128xf32, #tpu.memory_space<vmem>>, vector<16x128xf32>
    tpu.vector_store %arg5[%c0_6, %c0_7], %16 {strides = array<i32>} : memref<16x128xf32, #tpu.memory_space<vmem>>, vector<16x128xf32>,
    %c0_i32_8 = arith.constant 0 : i32
    %18 = arith.cmpi eq, %arg1, %c0_i32_8 : i32
    %19 = arith.extui %18 : i1 to i32
    %c0_i32_9 = arith.constant 0 : i32
    %20 = arith.cmpi ne, %19, %c0_i32_9 : i32
    scf.if %20 {
      %c0_10 = arith.constant 0 : index
      %c0_11 = arith.constant 0 : index
      %21 = vector.load %arg5[%c0_10, %c0_11] : memref<16x128xf32, #tpu.memory_space<vmem>>, vector<16x128xf32>
      %22 = vector.extract_strided_slice %21 {offsets = [0, 127], sizes = [16, 1], strides = [1, 1]} : vector<16x128xf32> to vector<16x1xf32>
      %cst_12 = arith.constant 1.000000e+00 : f32
      %23 = vector.broadcast %cst_12 : f32 to vector<16x1xf32>
      %24 = arith.maximumf %22, %23 : vector<16x1xf32>
      %25 = tpu.reciprocal %24 : vector<16x1xf32> -> vector<16x1xf32>
      %26 = vector.broadcast %25 : vector<16x1xf32> to vector<16x128xf32>
      %27 = arith.mulf %21, %26 : vector<16x128xf32>
      %c0_13 = arith.constant 0 : index
      %c0_14 = arith.constant 0 : index
      %28 = vector.load %arg4[%c0_13, %c0_14] : memref<16x128xf32, #tpu.memory_space<vmem>>, vector<16x128xf32>
      tpu.vector_store %arg4[%c0_13, %c0_14], %27 {strides = array<i32>} : memref<16x128xf32, #tpu.memory_space<vmem>>, vector<16x128xf32>,
    } else {
    }
    return
  }
  func.func @transform_0(%arg0: i32, %arg1: i32) -> (i32, i32) {
    %c0_i32 = arith.constant 0 : i32
    %c0_i32_0 = arith.constant 0 : i32
    return %c0_i32, %arg1 : i32, i32
  }
  func.func @transform_1(%arg0: i32, %arg1: i32) -> (i32, i32) {
    %c0_i32 = arith.constant 0 : i32
    %c0_i32_0 = arith.constant 0 : i32
    return %arg1, %c0_i32 : i32, i32
  }
  func.func @transform_2(%arg0: i32, %arg1: i32) -> (i32, i32) {
    %c0_i32 = arith.constant 0 : i32
    %c0_i32_0 = arith.constant 0 : i32
    return %arg0, %c0_i32 : i32, i32
  }
}

module attributes {stable_mosaic.version = 11 : i64} {
  func.func @_dual_mlp_kernel(%arg0: memref<16x32xf32, #tpu.memory_space<vmem>>, %arg1: memref<32x64xbf16, #tpu.memory_space<vmem>>, %arg2: memref<1x64xf32, #tpu.memory_space<vmem>>, %arg3: memref<1x64xf32, #tpu.memory_space<vmem>>, %arg4: memref<1x64xf32, #tpu.memory_space<vmem>>, %arg5: memref<64x64xbf16, #tpu.memory_space<vmem>>, %arg6: memref<1x64xf32, #tpu.memory_space<vmem>>, %arg7: memref<1x64xf32, #tpu.memory_space<vmem>>, %arg8: memref<1x64xf32, #tpu.memory_space<vmem>>, %arg9: memref<64x2xbf16, #tpu.memory_space<vmem>>, %arg10: memref<1x2xf32, #tpu.memory_space<vmem>>, %arg11: memref<16x2xf32, #tpu.memory_space<vmem>>) attributes {dimension_semantics = [], scalar_prefetch = 0 : i64, scratch_operands = 0 : i64, tpu.core_type = #tpu.core_type<tc>} {
    %c0 = arith.constant 0 : index
    %c0_0 = arith.constant 0 : index
    %0 = vector.load %arg0[%c0, %c0_0] : memref<16x32xf32, #tpu.memory_space<vmem>>, vector<16x32xf32>
    %1 = arith.truncf %0 : vector<16x32xf32> to vector<16x32xbf16>
    %c0_1 = arith.constant 0 : index
    %c0_2 = arith.constant 0 : index
    %2 = vector.load %arg1[%c0_1, %c0_2] : memref<32x64xbf16, #tpu.memory_space<vmem>>, vector<32x64xbf16>
    %cst = arith.constant dense<0.000000e+00> : vector<16x64xf32>
    %3 = tpu.matmul %1, %2, %cst {dimension_numbers = #tpu.dot_dimension_numbers<[1], [0], [0], [1], [0, 0, 1, 1], [], []>} : vector<16x32xbf16>, vector<32x64xbf16>, vector<16x64xf32> -> vector<16x64xf32>
    %c0_3 = arith.constant 0 : index
    %c0_4 = arith.constant 0 : index
    %4 = vector.load %arg2[%c0_3, %c0_4] : memref<1x64xf32, #tpu.memory_space<vmem>>, vector<1x64xf32>
    %5 = vector.broadcast %4 : vector<1x64xf32> to vector<16x64xf32>
    %6 = arith.addf %3, %5 : vector<16x64xf32>
    %cst_5 = arith.constant dense<0.000000e+00> : vector<64xf32>
    %7 = vector.multi_reduction <add>, %6, %cst_5 [0] : vector<16x64xf32> to vector<64xf32>
    %8 = vector.shape_cast %7 : vector<64xf32> to vector<1x64xf32>
    %cst_6 = arith.constant 1.600000e+01 : f32
    %9 = vector.broadcast %cst_6 : f32 to vector<1x64xf32>
    %10 = arith.divf %8, %9 : vector<1x64xf32>
    %11 = vector.broadcast %10 : vector<1x64xf32> to vector<16x64xf32>
    %12 = arith.subf %6, %11 : vector<16x64xf32>
    %13 = arith.mulf %12, %12 : vector<16x64xf32>
    %cst_7 = arith.constant dense<0.000000e+00> : vector<64xf32>
    %14 = vector.multi_reduction <add>, %13, %cst_7 [0] : vector<16x64xf32> to vector<64xf32>
    %15 = vector.shape_cast %14 : vector<64xf32> to vector<1x64xf32>
    %cst_8 = arith.constant 1.600000e+01 : f32
    %16 = vector.broadcast %cst_8 : f32 to vector<1x64xf32>
    %17 = arith.divf %15, %16 : vector<1x64xf32>
    %18 = vector.broadcast %10 : vector<1x64xf32> to vector<16x64xf32>
    %19 = arith.subf %6, %18 : vector<16x64xf32>
    %cst_9 = arith.constant 9.99999974E-5 : f32
    %20 = vector.broadcast %cst_9 : f32 to vector<1x64xf32>
    %21 = arith.addf %17, %20 : vector<1x64xf32>
    %22 = math.rsqrt %21 : vector<1x64xf32>
    %23 = vector.broadcast %22 : vector<1x64xf32> to vector<16x64xf32>
    %24 = arith.mulf %19, %23 : vector<16x64xf32>
    %c0_10 = arith.constant 0 : index
    %c0_11 = arith.constant 0 : index
    %25 = vector.load %arg3[%c0_10, %c0_11] : memref<1x64xf32, #tpu.memory_space<vmem>>, vector<1x64xf32>
    %26 = vector.broadcast %25 : vector<1x64xf32> to vector<16x64xf32>
    %27 = arith.mulf %24, %26 : vector<16x64xf32>
    %c0_12 = arith.constant 0 : index
    %c0_13 = arith.constant 0 : index
    %28 = vector.load %arg4[%c0_12, %c0_13] : memref<1x64xf32, #tpu.memory_space<vmem>>, vector<1x64xf32>
    %29 = vector.broadcast %28 : vector<1x64xf32> to vector<16x64xf32>
    %30 = arith.addf %27, %29 : vector<16x64xf32>
    %cst_14 = arith.constant 0.000000e+00 : f32
    %31 = vector.broadcast %cst_14 : f32 to vector<16x64xf32>
    %32 = arith.maximumf %30, %31 : vector<16x64xf32>
    %33 = arith.truncf %32 : vector<16x64xf32> to vector<16x64xbf16>
    %c0_15 = arith.constant 0 : index
    %c0_16 = arith.constant 0 : index
    %34 = vector.load %arg5[%c0_15, %c0_16] : memref<64x64xbf16, #tpu.memory_space<vmem>>, vector<64x64xbf16>
    %cst_17 = arith.constant dense<0.000000e+00> : vector<16x64xf32>
    %35 = tpu.matmul %33, %34, %cst_17 {dimension_numbers = #tpu.dot_dimension_numbers<[1], [0], [0], [1], [0, 0, 1, 1], [], []>} : vector<16x64xbf16>, vector<64x64xbf16>, vector<16x64xf32> -> vector<16x64xf32>
    %c0_18 = arith.constant 0 : index
    %c0_19 = arith.constant 0 : index
    %36 = vector.load %arg6[%c0_18, %c0_19] : memref<1x64xf32, #tpu.memory_space<vmem>>, vector<1x64xf32>
    %37 = vector.broadcast %36 : vector<1x64xf32> to vector<16x64xf32>
    %38 = arith.addf %35, %37 : vector<16x64xf32>
    %cst_20 = arith.constant dense<0.000000e+00> : vector<64xf32>
    %39 = vector.multi_reduction <add>, %38, %cst_20 [0] : vector<16x64xf32> to vector<64xf32>
    %40 = vector.shape_cast %39 : vector<64xf32> to vector<1x64xf32>
    %cst_21 = arith.constant 1.600000e+01 : f32
    %41 = vector.broadcast %cst_21 : f32 to vector<1x64xf32>
    %42 = arith.divf %40, %41 : vector<1x64xf32>
    %43 = vector.broadcast %42 : vector<1x64xf32> to vector<16x64xf32>
    %44 = arith.subf %38, %43 : vector<16x64xf32>
    %45 = arith.mulf %44, %44 : vector<16x64xf32>
    %cst_22 = arith.constant dense<0.000000e+00> : vector<64xf32>
    %46 = vector.multi_reduction <add>, %45, %cst_22 [0] : vector<16x64xf32> to vector<64xf32>
    %47 = vector.shape_cast %46 : vector<64xf32> to vector<1x64xf32>
    %cst_23 = arith.constant 1.600000e+01 : f32
    %48 = vector.broadcast %cst_23 : f32 to vector<1x64xf32>
    %49 = arith.divf %47, %48 : vector<1x64xf32>
    %50 = vector.broadcast %42 : vector<1x64xf32> to vector<16x64xf32>
    %51 = arith.subf %38, %50 : vector<16x64xf32>
    %cst_24 = arith.constant 9.99999974E-5 : f32
    %52 = vector.broadcast %cst_24 : f32 to vector<1x64xf32>
    %53 = arith.addf %49, %52 : vector<1x64xf32>
    %54 = math.rsqrt %53 : vector<1x64xf32>
    %55 = vector.broadcast %54 : vector<1x64xf32> to vector<16x64xf32>
    %56 = arith.mulf %51, %55 : vector<16x64xf32>
    %c0_25 = arith.constant 0 : index
    %c0_26 = arith.constant 0 : index
    %57 = vector.load %arg7[%c0_25, %c0_26] : memref<1x64xf32, #tpu.memory_space<vmem>>, vector<1x64xf32>
    %58 = vector.broadcast %57 : vector<1x64xf32> to vector<16x64xf32>
    %59 = arith.mulf %56, %58 : vector<16x64xf32>
    %c0_27 = arith.constant 0 : index
    %c0_28 = arith.constant 0 : index
    %60 = vector.load %arg8[%c0_27, %c0_28] : memref<1x64xf32, #tpu.memory_space<vmem>>, vector<1x64xf32>
    %61 = vector.broadcast %60 : vector<1x64xf32> to vector<16x64xf32>
    %62 = arith.addf %59, %61 : vector<16x64xf32>
    %cst_29 = arith.constant 0.000000e+00 : f32
    %63 = vector.broadcast %cst_29 : f32 to vector<16x64xf32>
    %64 = arith.maximumf %62, %63 : vector<16x64xf32>
    %65 = arith.truncf %64 : vector<16x64xf32> to vector<16x64xbf16>
    %c0_30 = arith.constant 0 : index
    %c0_31 = arith.constant 0 : index
    %66 = vector.load %arg9[%c0_30, %c0_31] : memref<64x2xbf16, #tpu.memory_space<vmem>>, vector<64x2xbf16>
    %cst_32 = arith.constant dense<0.000000e+00> : vector<16x2xf32>
    %67 = tpu.matmul %65, %66, %cst_32 {dimension_numbers = #tpu.dot_dimension_numbers<[1], [0], [0], [1], [0, 0, 1, 1], [], []>} : vector<16x64xbf16>, vector<64x2xbf16>, vector<16x2xf32> -> vector<16x2xf32>
    %c0_33 = arith.constant 0 : index
    %c0_34 = arith.constant 0 : index
    %68 = vector.load %arg10[%c0_33, %c0_34] : memref<1x2xf32, #tpu.memory_space<vmem>>, vector<1x2xf32>
    %69 = vector.broadcast %68 : vector<1x2xf32> to vector<16x2xf32>
    %70 = arith.addf %67, %69 : vector<16x2xf32>
    %c0_35 = arith.constant 0 : index
    %c0_36 = arith.constant 0 : index
    %71 = vector.load %arg11[%c0_35, %c0_36] : memref<16x2xf32, #tpu.memory_space<vmem>>, vector<16x2xf32>
    tpu.vector_store %arg11[%c0_35, %c0_36], %70 {strides = array<i32>} : memref<16x2xf32, #tpu.memory_space<vmem>>, vector<16x2xf32>,
    return
  }
}

</mosaic_0001>

<llo_original>
// kernel: spformer_forward.5
$region0: #{spformer_forward.5}
  #allocation0 [shape = 'u32[]', space=smem, size = 0x4, offset = 0x4, fixed_abs, tag = 'smem constant byte address 0x4 - core index']
  #allocation1 [shape = 'u32[144,128]{1,0:T(1,128)}', space=vmem, size = 0x12000, scoped, tag = 'internal scratch']
  %s0 = inlined_call_operand.vmem [shape: f32[64,6], index: 0, kind: input, shape index: {}]
  %s1 = inlined_call_operand.vmem [shape: bf16[6,32], index: 1, kind: input, shape index: {}]
  %s2 = inlined_call_operand.vmem [shape: f32[1,32], index: 2, kind: input, shape index: {}]
  %s3 = inlined_call_operand.vmem [shape: f32[1,32], index: 3, kind: input, shape index: {}]
  %s4 = inlined_call_operand.vmem [shape: bf16[32,32], index: 4, kind: input, shape index: {}]
  %s5 = inlined_call_operand.vmem [shape: f32[1,32], index: 5, kind: input, shape index: {}]
  %s6 = inlined_call_operand.vmem [shape: f32[1,32], index: 6, kind: input, shape index: {}]
  %s7 = inlined_call_operand.vmem [shape: bf16[32,32], index: 7, kind: input, shape index: {}]
  %s8 = inlined_call_operand.vmem [shape: f32[1,32], index: 8, kind: input, shape index: {}]
  %s9 = inlined_call_operand.vmem [shape: f32[1,32], index: 9, kind: input, shape index: {}]
  %s10 = inlined_call_operand.vmem [shape: f32[64,32], index: 10, kind: output, shape index: {}]
  %s11 = sld [smem:[#allocation0]]
  $region50: #{spformer_forward.5} parent=0
    _
  %s13 = ssub.s32 1, %s11
  %s14 = scalar_select 0, %s13, %s11
  // Predicated region
  $region2: #{spformer_forward.5} parent=0 // pred_check
    _
  $region3: #{spformer_forward.5} parent=0 // pred_check_branch
    %16 = sbr.rel (0) target = $region5
  $region4: #{spformer_forward.5} parent=0 // pred_region
    _
  $region5: #{spformer_forward.5} parent=0 // pred_fallthru
    _
  // Predicated region
  $region6: #{spformer_forward.5} parent=0 // pred_check
    _
  $region7: #{spformer_forward.5} parent=0 // pred_check_branch
    %18 = sbr.rel (0) target = $region9
  $region8: #{spformer_forward.5} parent=0 // pred_region
    _
  $region9: #{spformer_forward.5} parent=0 // pred_fallthru
    _
  // Predicated region
  $region10: #{spformer_forward.5} parent=0 // pred_check
    _
  $region11: #{spformer_forward.5} parent=0 // pred_check_branch
    %20 = sbr.rel (0) target = $region13
  $region12: #{spformer_forward.5} parent=0 // pred_region
    _
  $region13: #{spformer_forward.5} parent=0 // pred_fallthru
    _
  // Predicated region
  $region14: #{spformer_forward.5} parent=0 // pred_check
    _
  $region15: #{spformer_forward.5} parent=0 // pred_check_branch
    %22 = sbr.rel (0) target = $region17
  $region16: #{spformer_forward.5} parent=0 // pred_region
    _
  $region17: #{spformer_forward.5} parent=0 // pred_fallthru
    _
  // Predicated region
  $region18: #{spformer_forward.5} parent=0 // pred_check
    _
  $region19: #{spformer_forward.5} parent=0 // pred_check_branch
    %24 = sbr.rel (0) target = $region21
  $region20: #{spformer_forward.5} parent=0 // pred_region
    _
  $region21: #{spformer_forward.5} parent=0 // pred_fallthru
    _
  // Predicated region
  $region22: #{spformer_forward.5} parent=0 // pred_check
    _
  $region23: #{spformer_forward.5} parent=0 // pred_check_branch
    %26 = sbr.rel (0) target = $region25
  $region24: #{spformer_forward.5} parent=0 // pred_region
    _
  $region25: #{spformer_forward.5} parent=0 // pred_fallthru
    _
  // Predicated region
  $region26: #{spformer_forward.5} parent=0 // pred_check
    _
  $region27: #{spformer_forward.5} parent=0 // pred_check_branch
    %28 = sbr.rel (0) target = $region29
  $region28: #{spformer_forward.5} parent=0 // pred_region
    _
  $region29: #{spformer_forward.5} parent=0 // pred_fallthru
    _
  // Predicated region
  $region30: #{spformer_forward.5} parent=0 // pred_check
    _
  $region31: #{spformer_forward.5} parent=0 // pred_check_branch
    %30 = sbr.rel (0) target = $region33
  $region32: #{spformer_forward.5} parent=0 // pred_region
    _
  $region33: #{spformer_forward.5} parent=0 // pred_fallthru
    _
  // Predicated region
  $region34: #{spformer_forward.5} parent=0 // pred_check
    _
  $region35: #{spformer_forward.5} parent=0 // pred_check_branch
    %32 = sbr.rel (0) target = $region37
  $region36: #{spformer_forward.5} parent=0 // pred_region
    _
  $region37: #{spformer_forward.5} parent=0 // pred_fallthru
    _
  // Predicated region
  $region38: #{spformer_forward.5} parent=0 // pred_check
    _
  $region39: #{spformer_forward.5} parent=0 // pred_check_branch
    %34 = sbr.rel (0) target = $region41
  $region40: #{spformer_forward.5} parent=0 // pred_region
    _
  $region41: #{spformer_forward.5} parent=0 // pred_fallthru
    _
  %v36 = vld [vmem:[%s0] sm:$0xff]
  %v37 = vld [vmem:[%s0 + $0x8] sm:$0xff]
  %v38 = vld [vmem:[%s0 + $0x10] sm:$0xff]
  %v39 = vld [vmem:[%s0 + $0x18] sm:$0xff]
  %v40 = vld [vmem:[%s0 + $0x20] sm:$0xff]
  %v41 = vld [vmem:[%s0 + $0x28] sm:$0xff]
  %v42 = vld [vmem:[%s0 + $0x30] sm:$0xff]
  %v43 = vld [vmem:[%s0 + $0x38] sm:$0xff]
  %v44 = vpack.c.bf16 %v37, %v36
  %v45 = vpack.c.bf16 %v39, %v38
  %v46 = vpack.c.bf16 %v41, %v40
  %v47 = vpack.c.bf16 %v43, %v42
  %v48 = vld [vmem:[%s1] sm:$0x7]
  %vm49 = vcmask 48128
  %v51 = vsel %vm49, %v44, 0
  %v54 = vsel %vm49, %v45, 0
  %v57 = vsel %vm49, %v46, 0
  %v60 = vsel %vm49, %v47, 0
  %vm62 = vcmask 1042432
  %v64 = vsel %vm62, %v48, 0
  %66 = vmatprep.subr.bf16.mxu0 0
  %67 = vmatpush1.bf16.msra.mxu0 %v64
  %68 = vmatprep.subr.bf16.mxu0 0
  %69 = vmatpush1.bf16.msra.mxu0 0
  %70 = vmatprep.subr.bf16.mxu0 0
  %71 = vmatpush1.bf16.msra.mxu0 0
  %72 = vmatprep.subr.bf16.mxu0 0
  %73 = vmatpush1.bf16.msra.mxu0 0
  %74 = vmatprep.subr.bf16.mxu0 0
  %75 = vmatpush1.bf16.msra.mxu0 0
  %76 = vmatprep.subr.bf16.mxu0 0
  %77 = vmatpush1.bf16.msra.mxu0 0
  %78 = vmatprep.subr.bf16.mxu0 0
  %79 = vmatpush1.bf16.msra.mxu0 0
  %80 = vmatprep.subr.bf16.mxu0 0
  %81 = vmatpush1.bf16.msra.mxu0 0
  %82 = vmatprep.subr.bf16.mxu0 0
  %83 = vmatpush1.bf16.msra.mxu0 0
  %84 = vmatprep.subr.bf16.mxu0 0
  %85 = vmatpush1.bf16.msra.mxu0 0
  %86 = vmatprep.subr.bf16.mxu0 0
  %87 = vmatpush1.bf16.msra.mxu0 0
  %88 = vmatprep.subr.bf16.mxu0 0
  %89 = vmatpush1.bf16.msra.mxu0 0
  %90 = vmatprep.subr.bf16.mxu0 0
  %91 = vmatpush1.bf16.msra.mxu0 0
  %92 = vmatprep.subr.bf16.mxu0 0
  %93 = vmatpush1.bf16.msra.mxu0 0
  %94 = vmatprep.subr.bf16.mxu0 0
  %95 = vmatpush1.bf16.msra.mxu0 0
  %96 = vmatprep.subr.bf16.mxu0 0
  %97 = vmatpush1.bf16.msra.mxu0 0
  %98 = vmatprep.mubr.bf16.mxu0 0
  %99 = vmatmul.mubr.bf16.gmra.mrb[0].mxu0 %v51
  %v100 = vpop.f32.mrb[0].mxu0
  %v101 = vadd.f32 0.0, %v100
  %v102 = vpop.f32.mrb[0].mxu0
  %v103 = vpop.f32.mrb[0].mxu0
  %v104 = vadd.f32 0.0, %v103
  %v105 = vpop.f32.mrb[0].mxu0
  %106 = vmatprep.mubr.bf16.mxu0 0
  %107 = vmatmul.mubr.bf16.gmra.mrb[0].mxu0 %v54
  %v108 = vpop.f32.mrb[0].mxu0
  %v109 = vadd.f32 0.0, %v108
  %v110 = vpop.f32.mrb[0].mxu0
  %v111 = vpop.f32.mrb[0].mxu0
  %v112 = vadd.f32 0.0, %v111
  %v113 = vpop.f32.mrb[0].mxu0
  %114 = vmatprep.mubr.bf16.mxu0 0
  %115 = vmatmul.mubr.bf16.gmra.mrb[0].mxu0 %v57
  %v116 = vpop.f32.mrb[0].mxu0
  %v117 = vadd.f32 0.0, %v116
  %v118 = vpop.f32.mrb[0].mxu0
  %v119 = vpop.f32.mrb[0].mxu0
  %v120 = vadd.f32 0.0, %v119
  %v121 = vpop.f32.mrb[0].mxu0
  %122 = vmatprep.mubr.bf16.mxu0 0
  %123 = vmatmul.mubr.bf16.gmra.mrb[0].mxu0 %v60
  %v124 = vpop.f32.mrb[0].mxu0
  %v125 = vadd.f32 0.0, %v124
  %v126 = vpop.f32.mrb[0].mxu0
  %v127 = vpop.f32.mrb[0].mxu0
  %v128 = vadd.f32 0.0, %v127
  %v129 = vpop.f32.mrb[0].mxu0
  %130 = vdwg.mxu0
  %vm131 = vcmask 261120
  %v132 = vsel %vm131, %v101, 0.0
  %v133 = vsel %vm131, %v104, 0.0
  %v134 = vadd.f32 %v132, %v133
  %v135 = vsel %vm131, %v109, 0.0
  %v136 = vadd.f32 %v134, %v135
  %v137 = vsel %vm131, %v112, 0.0
  %v138 = vadd.f32 %v136, %v137
  %v139 = vsel %vm131, %v117, 0.0
  %v140 = vadd.f32 %v138, %v139
  %v141 = vsel %vm131, %v120, 0.0
  %v142 = vadd.f32 %v140, %v141
  %v143 = vsel %vm131, %v125, 0.0
  %v144 = vadd.f32 %v142, %v143
  %v145 = vsel %vm131, %v128, 0.0
  %v146 = vadd.f32 %v144, %v145
  %v147 = vrot.slane %v146, 4
  %v148 = vadd.f32 %v146, %v147
  %v149 = vrot.slane %v148, 2
  %v150 = vadd.f32 %v148, %v149
  %v151 = vrot.slane %v150, 1
  %v152 = vadd.f32 %v150, %v151
  %v153 = vrcp.pop 64.0
  %v154 = vmul.f32 %v152, %v153
  %v155 = vsub.f32 %v101, %v154
  %v156 = vsub.f32 %v104, %v154
  %v157 = vsub.f32 %v109, %v154
  %v158 = vsub.f32 %v112, %v154
  %v159 = vsub.f32 %v117, %v154
  %v160 = vsub.f32 %v120, %v154
  %v161 = vsub.f32 %v125, %v154
  %v162 = vsub.f32 %v128, %v154
  %v163 = vmul.f32 %v155, %v155
  %v164 = vmul.f32 %v156, %v156
  %v165 = vmul.f32 %v157, %v157
  %v166 = vmul.f32 %v158, %v158
  %v167 = vmul.f32 %v159, %v159
  %v168 = vmul.f32 %v160, %v160
  %v169 = vmul.f32 %v161, %v161
  %v170 = vmul.f32 %v162, %v162
  %v171 = vsel %vm131, %v163, 0.0
  %v172 = vsel %vm131, %v164, 0.0
  %v173 = vadd.f32 %v171, %v172
  %v174 = vsel %vm131, %v165, 0.0
  %v175 = vadd.f32 %v173, %v174
  %v176 = vsel %vm131, %v166, 0.0
  %v177 = vadd.f32 %v175, %v176
  %v178 = vsel %vm131, %v167, 0.0
  %v179 = vadd.f32 %v177, %v178
  %v180 = vsel %vm131, %v168, 0.0
  %v181 = vadd.f32 %v179, %v180
  %v182 = vsel %vm131, %v169, 0.0
  %v183 = vadd.f32 %v181, %v182
  %v184 = vsel %vm131, %v170, 0.0
  %v185 = vadd.f32 %v183, %v184
  %v186 = vrot.slane %v185, 4
  %v187 = vadd.f32 %v185, %v186
  %v188 = vrot.slane %v187, 2
  %v189 = vadd.f32 %v187, %v188
  %v190 = vrot.slane %v189, 1
  %v191 = vadd.f32 %v189, %v190
  %v192 = vmul.f32 %v191, %v153
  %v193 = vadd.f32 %v192, 0.0001
  %v194 = vrsqrt.pop %v193
  %v195 = vmul.f32 %v155, %v194
  %v196 = vmul.f32 %v156, %v194
  %v197 = vmul.f32 %v157, %v194
  %v198 = vmul.f32 %v158, %v194
  %v199 = vmul.f32 %v159, %v194
  %v200 = vmul.f32 %v160, %v194
  %v201 = vmul.f32 %v161, %v194
  %v202 = vmul.f32 %v162, %v194
  %v203 = vld [vmem:[%s2] sm:$0x1]
  %v205 = vlaneseq
  %v206 = vshrl.u32 %v205, 7
  %v207 = vsub.s32 0, %v206
  %v208 = vrot.slane %v203, %v207
  %v210 = vmul.f32 %v195, %v208
  %v211 = vmul.f32 %v196, %v208
  %v212 = vmul.f32 %v197, %v208
  %v213 = vmul.f32 %v198, %v208
  %v214 = vmul.f32 %v199, %v208
  %v215 = vmul.f32 %v200, %v208
  %v216 = vmul.f32 %v201, %v208
  %v217 = vmul.f32 %v202, %v208
  %v218 = vld [vmem:[%s3] sm:$0x1]
  %v220 = vlaneseq
  %v221 = vshrl.u32 %v220, 7
  %v222 = vsub.s32 0, %v221
  %v223 = vrot.slane %v218, %v222
  %v225 = vadd.f32 %v210, %v223
  %v226 = vadd.f32 %v211, %v223
  %v227 = vadd.f32 %v212, %v223
  %v228 = vadd.f32 %v213, %v223
  %v229 = vadd.f32 %v214, %v223
  %v230 = vadd.f32 %v215, %v223
  %v231 = vadd.f32 %v216, %v223
  %v232 = vadd.f32 %v217, %v223
  %v233 = vmax.f32 %v225, 0.0
  %v234 = vmax.f32 %v226, 0.0
  %v235 = vmax.f32 %v227, 0.0
  %v236 = vmax.f32 %v228, 0.0
  %v237 = vmax.f32 %v229, 0.0
  %v238 = vmax.f32 %v230, 0.0
  %v239 = vmax.f32 %v231, 0.0
  %v240 = vmax.f32 %v232, 0.0
  %v241 = vpack.c.bf16 %v234, %v233
  %v242 = vpack.c.bf16 %v236, %v235
  %v243 = vpack.c.bf16 %v238, %v237
  %v244 = vpack.c.bf16 %v240, %v239
  %v245 = vld [vmem:[%s4] sm:$0xf]
  %v246 = vld [vmem:[%s4 + $0x4] sm:$0xf]
  %v247 = vld [vmem:[%s4 + $0x8] sm:$0xf]
  %v248 = vld [vmem:[%s4 + $0xc] sm:$0xf]
  %v253 = vunpack.c.l.b16 %v245
  %v254 = vunpack.c.l.b16 %v246
  %v255 = vunpack.c.l.b16 %v247
  %v256 = vunpack.c.l.b16 %v248
  %v257 = vpack.c.b16 %v254, %v253
  %v258 = vpack.c.b16 %v256, %v255
  %v262 = vsel %vm131, %v241, 0
  %v265 = vsel %vm131, %v242, 0
  %v268 = vsel %vm131, %v243, 0
  %v271 = vsel %vm131, %v244, 0
  %273 = vmatprep.subr.bf16.mxu0 0
  %274 = vmatpush1.bf16.msra.mxu0 %v257
  %275 = vmatprep.subr.bf16.mxu0 0
  %276 = vmatpush1.bf16.msra.mxu0 %v258
  %277 = vmatprep.subr.bf16.mxu0 0
  %278 = vmatpush1.bf16.msra.mxu0 0
  %279 = vmatprep.subr.bf16.mxu0 0
  %280 = vmatpush1.bf16.msra.mxu0 0
  %281 = vmatprep.subr.bf16.mxu0 0
  %282 = vmatpush1.bf16.msra.mxu0 0
  %283 = vmatprep.subr.bf16.mxu0 0
  %284 = vmatpush1.bf16.msra.mxu0 0
  %285 = vmatprep.subr.bf16.mxu0 0
  %286 = vmatpush1.bf16.msra.mxu0 0
  %287 = vmatprep.subr.bf16.mxu0 0
  %288 = vmatpush1.bf16.msra.mxu0 0
  %289 = vmatprep.subr.bf16.mxu0 0
  %290 = vmatpush1.bf16.msra.mxu0 0
  %291 = vmatprep.subr.bf16.mxu0 0
  %292 = vmatpush1.bf16.msra.mxu0 0
  %293 = vmatprep.subr.bf16.mxu0 0
  %294 = vmatpush1.bf16.msra.mxu0 0
  %295 = vmatprep.subr.bf16.mxu0 0
  %296 = vmatpush1.bf16.msra.mxu0 0
  %297 = vmatprep.subr.bf16.mxu0 0
  %298 = vmatpush1.bf16.msra.mxu0 0
  %299 = vmatprep.subr.bf16.mxu0 0
  %300 = vmatpush1.bf16.msra.mxu0 0
  %301 = vmatprep.subr.bf16.mxu0 0
  %302 = vmatpush1.bf16.msra.mxu0 0
  %303 = vmatprep.subr.bf16.mxu0 0
  %304 = vmatpush1.bf16.msra.mxu0 0
  %305 = vmatprep.mubr.bf16.mxu0 0
  %306 = vmatmul.mubr.bf16.gmra.mrb[0].mxu0 %v262
  %v307 = vpop.f32.mrb[0].mxu0
  %v308 = vadd.f32 0.0, %v307
  %v309 = vpop.f32.mrb[0].mxu0
  %v310 = vpop.f32.mrb[0].mxu0
  %v311 = vadd.f32 0.0, %v310
  %v312 = vpop.f32.mrb[0].mxu0
  %313 = vmatprep.mubr.bf16.mxu0 0
  %314 = vmatmul.mubr.bf16.gmra.mrb[0].mxu0 %v265
  %v315 = vpop.f32.mrb[0].mxu0
  %v316 = vadd.f32 0.0, %v315
  %v317 = vpop.f32.mrb[0].mxu0
  %v318 = vpop.f32.mrb[0].mxu0
  %v319 = vadd.f32 0.0, %v318
  %v320 = vpop.f32.mrb[0].mxu0
  %321 = vmatprep.mubr.bf16.mxu0 0
  %322 = vmatmul.mubr.bf16.gmra.mrb[0].mxu0 %v268
  %v323 = vpop.f32.mrb[0].mxu0
  %v324 = vadd.f32 0.0, %v323
  %v325 = vpop.f32.mrb[0].mxu0
  %v326 = vpop.f32.mrb[0].mxu0
  %v327 = vadd.f32 0.0, %v326
  %v328 = vpop.f32.mrb[0].mxu0
  %329 = vmatprep.mubr.bf16.mxu0 0
  %330 = vmatmul.mubr.bf16.gmra.mrb[0].mxu0 %v271
  %v331 = vpop.f32.mrb[0].mxu0
  %v332 = vadd.f32 0.0, %v331
  %v333 = vpop.f32.mrb[0].mxu0
  %v334 = vpop.f32.mrb[0].mxu0
  %v335 = vadd.f32 0.0, %v334
  %v336 = vpop.f32.mrb[0].mxu0
  %337 = vdwg.mxu0
  %v338 = vsel %vm131, %v308, 0.0
  %v339 = vsel %vm131, %v311, 0.0
  %v340 = vadd.f32 %v338, %v339
  %v341 = vsel %vm131, %v316, 0.0
  %v342 = vadd.f32 %v340, %v341
  %v343 = vsel %vm131, %v319, 0.0
  %v344 = vadd.f32 %v342, %v343
  %v345 = vsel %vm131, %v324, 0.0
  %v346 = vadd.f32 %v344, %v345
  %v347 = vsel %vm131, %v327, 0.0
  %v348 = vadd.f32 %v346, %v347
  %v349 = vsel %vm131, %v332, 0.0
  %v350 = vadd.f32 %v348, %v349
  %v351 = vsel %vm131, %v335, 0.0
  %v352 = vadd.f32 %v350, %v351
  %v353 = vrot.slane %v352, 4
  %v354 = vadd.f32 %v352, %v353
  %v355 = vrot.slane %v354, 2
  %v356 = vadd.f32 %v354, %v355
  %v357 = vrot.slane %v356, 1
  %v358 = vadd.f32 %v356, %v357
  %v359 = vmul.f32 %v358, %v153
  %v360 = vsub.f32 %v308, %v359
  %v361 = vsub.f32 %v311, %v359
  %v362 = vsub.f32 %v316, %v359
  %v363 = vsub.f32 %v319, %v359
  %v364 = vsub.f32 %v324, %v359
  %v365 = vsub.f32 %v327, %v359
  %v366 = vsub.f32 %v332, %v359
  %v367 = vsub.f32 %v335, %v359
  %v368 = vmul.f32 %v360, %v360
  %v369 = vmul.f32 %v361, %v361
  %v370 = vmul.f32 %v362, %v362
  %v371 = vmul.f32 %v363, %v363
  %v372 = vmul.f32 %v364, %v364
  %v373 = vmul.f32 %v365, %v365
  %v374 = vmul.f32 %v366, %v366
  %v375 = vmul.f32 %v367, %v367
  %v376 = vsel %vm131, %v368, 0.0
  %v377 = vsel %vm131, %v369, 0.0
  %v378 = vadd.f32 %v376, %v377
  %v379 = vsel %vm131, %v370, 0.0
  %v380 = vadd.f32 %v378, %v379
  %v381 = vsel %vm131, %v371, 0.0
  %v382 = vadd.f32 %v380, %v381
  %v383 = vsel %vm131, %v372, 0.0
  %v384 = vadd.f32 %v382, %v383
  %v385 = vsel %vm131, %v373, 0.0
  %v386 = vadd.f32 %v384, %v385
  %v387 = vsel %vm131, %v374, 0.0
  %v388 = vadd.f32 %v386, %v387
  %v389 = vsel %vm131, %v375, 0.0
  %v390 = vadd.f32 %v388, %v389
  %v391 = vrot.slane %v390, 4
  %v392 = vadd.f32 %v390, %v391
  %v393 = vrot.slane %v392, 2
  %v394 = vadd.f32 %v392, %v393
  %v395 = vrot.slane %v394, 1
  %v396 = vadd.f32 %v394, %v395
  %v397 = vmul.f32 %v396, %v153
  %v398 = vadd.f32 %v397, 0.0001
  %v399 = vrsqrt.pop %v398
  %v400 = vmul.f32 %v360, %v399
  %v401 = vmul.f32 %v361, %v399
  %v402 = vmul.f32 %v362, %v399
  %v403 = vmul.f32 %v363, %v399
  %v404 = vmul.f32 %v364, %v399
  %v405 = vmul.f32 %v365, %v399
  %v406 = vmul.f32 %v366, %v399
  %v407 = vmul.f32 %v367, %v399
  %v408 = vld [vmem:[%s5] sm:$0x1]
  %v410 = vlaneseq
  %v411 = vshrl.u32 %v410, 7
  %v412 = vsub.s32 0, %v411
  %v413 = vrot.slane %v408, %v412
  %v415 = vmul.f32 %v400, %v413
  %v416 = vmul.f32 %v401, %v413
  %v417 = vmul.f32 %v402, %v413
  %v418 = vmul.f32 %v403, %v413
  %v419 = vmul.f32 %v404, %v413
  %v420 = vmul.f32 %v405, %v413
  %v421 = vmul.f32 %v406, %v413
  %v422 = vmul.f32 %v407, %v413
  %v423 = vld [vmem:[%s6] sm:$0x1]
  %v425 = vlaneseq
  %v426 = vshrl.u32 %v425, 7
  %v427 = vsub.s32 0, %v426
  %v428 = vrot.slane %v423, %v427
  %v430 = vadd.f32 %v415, %v428
  %v431 = vadd.f32 %v416, %v428
  %v432 = vadd.f32 %v417, %v428
  %v433 = vadd.f32 %v418, %v428
  %v434 = vadd.f32 %v419, %v428
  %v435 = vadd.f32 %v420, %v428
  %v436 = vadd.f32 %v421, %v428
  %v437 = vadd.f32 %v422, %v428
  %v438 = vmax.f32 %v430, 0.0
  %v439 = vmax.f32 %v431, 0.0
  %v440 = vmax.f32 %v432, 0.0
  %v441 = vmax.f32 %v433, 0.0
  %v442 = vmax.f32 %v434, 0.0
  %v443 = vmax.f32 %v435, 0.0
  %v444 = vmax.f32 %v436, 0.0
  %v445 = vmax.f32 %v437, 0.0
  %v446 = vpack.c.bf16 %v439, %v438
  %v447 = vpack.c.bf16 %v441, %v440
  %v448 = vpack.c.bf16 %v443, %v442
  %v449 = vpack.c.bf16 %v445, %v444
  %v450 = vld [vmem:[%s7] sm:$0xf]
  %v451 = vld [vmem:[%s7 + $0x4] sm:$0xf]
  %v452 = vld [vmem:[%s7 + $0x8] sm:$0xf]
  %v453 = vld [vmem:[%s7 + $0xc] sm:$0xf]
  %v458 = vunpack.c.l.b16 %v450
  %v459 = vunpack.c.l.b16 %v451
  %v460 = vunpack.c.l.b16 %v452
  %v461 = vunpack.c.l.b16 %v453
  %v462 = vpack.c.b16 %v459, %v458
  %v463 = vpack.c.b16 %v461, %v460
  %v467 = vsel %vm131, %v446, 0
  %v470 = vsel %vm131, %v447, 0
  %v473 = vsel %vm131, %v448, 0
  %v476 = vsel %vm131, %v449, 0
  %478 = vmatprep.subr.bf16.mxu0 0
  %479 = vmatpush1.bf16.msra.mxu0 %v462
  %480 = vmatprep.subr.bf16.mxu0 0
  %481 = vmatpush1.bf16.msra.mxu0 %v463
  %482 = vmatprep.subr.bf16.mxu0 0
  %483 = vmatpush1.bf16.msra.mxu0 0
  %484 = vmatprep.subr.bf16.mxu0 0
  %485 = vmatpush1.bf16.msra.mxu0 0
  %486 = vmatprep.subr.bf16.mxu0 0
  %487 = vmatpush1.bf16.msra.mxu0 0
  %488 = vmatprep.subr.bf16.mxu0 0
  %489 = vmatpush1.bf16.msra.mxu0 0
  %490 = vmatprep.subr.bf16.mxu0 0
  %491 = vmatpush1.bf16.msra.mxu0 0
  %492 = vmatprep.subr.bf16.mxu0 0
  %493 = vmatpush1.bf16.msra.mxu0 0
  %494 = vmatprep.subr.bf16.mxu0 0
  %495 = vmatpush1.bf16.msra.mxu0 0
  %496 = vmatprep.subr.bf16.mxu0 0
  %497 = vmatpush1.bf16.msra.mxu0 0
  %498 = vmatprep.subr.bf16.mxu0 0
  %499 = vmatpush1.bf16.msra.mxu0 0
  %500 = vmatprep.subr.bf16.mxu0 0
  %501 = vmatpush1.bf16.msra.mxu0 0
  %502 = vmatprep.subr.bf16.mxu0 0
  %503 = vmatpush1.bf16.msra.mxu0 0
  %504 = vmatprep.subr.bf16.mxu0 0
  %505 = vmatpush1.bf16.msra.mxu0 0
  %506 = vmatprep.subr.bf16.mxu0 0
  %507 = vmatpush1.bf16.msra.mxu0 0
  %508 = vmatprep.subr.bf16.mxu0 0
  %509 = vmatpush1.bf16.msra.mxu0 0
  %510 = vmatprep.mubr.bf16.mxu0 0
  %511 = vmatmul.mubr.bf16.gmra.mrb[0].mxu0 %v467
  %v512 = vpop.f32.mrb[0].mxu0
  %v513 = vadd.f32 0.0, %v512
  %v514 = vpop.f32.mrb[0].mxu0
  %v515 = vpop.f32.mrb[0].mxu0
  %v516 = vadd.f32 0.0, %v515
  %v517 = vpop.f32.mrb[0].mxu0
  %518 = vmatprep.mubr.bf16.mxu0 0
  %519 = vmatmul.mubr.bf16.gmra.mrb[0].mxu0 %v470
  %v520 = vpop.f32.mrb[0].mxu0
  %v521 = vadd.f32 0.0, %v520
  %v522 = vpop.f32.mrb[0].mxu0
  %v523 = vpop.f32.mrb[0].mxu0
  %v524 = vadd.f32 0.0, %v523
  %v525 = vpop.f32.mrb[0].mxu0
  %526 = vmatprep.mubr.bf16.mxu0 0
  %527 = vmatmul.mubr.bf16.gmra.mrb[0].mxu0 %v473
  %v528 = vpop.f32.mrb[0].mxu0
  %v529 = vadd.f32 0.0, %v528
  %v530 = vpop.f32.mrb[0].mxu0
  %v531 = vpop.f32.mrb[0].mxu0
  %v532 = vadd.f32 0.0, %v531
  %v533 = vpop.f32.mrb[0].mxu0
  %534 = vmatprep.mubr.bf16.mxu0 0
  %535 = vmatmul.mubr.bf16.gmra.mrb[0].mxu0 %v476
  %v536 = vpop.f32.mrb[0].mxu0
  %v537 = vadd.f32 0.0, %v536
  %v538 = vpop.f32.mrb[0].mxu0
  %v539 = vpop.f32.mrb[0].mxu0
  %v540 = vadd.f32 0.0, %v539
  %v541 = vpop.f32.mrb[0].mxu0
  %542 = vdwg.mxu0
  %v543 = vadd.f32 %v101, %v513
  %v544 = vadd.f32 %v104, %v516
  %v545 = vadd.f32 %v109, %v521
  %v546 = vadd.f32 %v112, %v524
  %v547 = vadd.f32 %v117, %v529
  %v548 = vadd.f32 %v120, %v532
  %v549 = vadd.f32 %v125, %v537
  %v550 = vadd.f32 %v128, %v540
  %v551 = vsel %vm131, %v543, 0.0
  %v552 = vsel %vm131, %v544, 0.0
  %v553 = vadd.f32 %v551, %v552
  %v554 = vsel %vm131, %v545, 0.0
  %v555 = vadd.f32 %v553, %v554
  %v556 = vsel %vm131, %v546, 0.0
  %v557 = vadd.f32 %v555, %v556
  %v558 = vsel %vm131, %v547, 0.0
  %v559 = vadd.f32 %v557, %v558
  %v560 = vsel %vm131, %v548, 0.0
  %v561 = vadd.f32 %v559, %v560
  %v562 = vsel %vm131, %v549, 0.0
  %v563 = vadd.f32 %v561, %v562
  %v564 = vsel %vm131, %v550, 0.0
  %v565 = vadd.f32 %v563, %v564
  %v566 = vrot.slane %v565, 4
  %v567 = vadd.f32 %v565, %v566
  %v568 = vrot.slane %v567, 2
  %v569 = vadd.f32 %v567, %v568
  %v570 = vrot.slane %v569, 1
  %v571 = vadd.f32 %v569, %v570
  %v572 = vmul.f32 %v571, %v153
  %v573 = vsub.f32 %v543, %v572
  %v574 = vsub.f32 %v544, %v572
  %v575 = vsub.f32 %v545, %v572
  %v576 = vsub.f32 %v546, %v572
  %v577 = vsub.f32 %v547, %v572
  %v578 = vsub.f32 %v548, %v572
  %v579 = vsub.f32 %v549, %v572
  %v580 = vsub.f32 %v550, %v572
  %v581 = vmul.f32 %v573, %v573
  %v582 = vmul.f32 %v574, %v574
  %v583 = vmul.f32 %v575, %v575
  %v584 = vmul.f32 %v576, %v576
  %v585 = vmul.f32 %v577, %v577
  %v586 = vmul.f32 %v578, %v578
  %v587 = vmul.f32 %v579, %v579
  %v588 = vmul.f32 %v580, %v580
  %v589 = vsel %vm131, %v581, 0.0
  %v590 = vsel %vm131, %v582, 0.0
  %v591 = vadd.f32 %v589, %v590
  %v592 = vsel %vm131, %v583, 0.0
  %v593 = vadd.f32 %v591, %v592
  %v594 = vsel %vm131, %v584, 0.0
  %v595 = vadd.f32 %v593, %v594
  %v596 = vsel %vm131, %v585, 0.0
  %v597 = vadd.f32 %v595, %v596
  %v598 = vsel %vm131, %v586, 0.0
  %v599 = vadd.f32 %v597, %v598
  %v600 = vsel %vm131, %v587, 0.0
  %v601 = vadd.f32 %v599, %v600
  %v602 = vsel %vm131, %v588, 0.0
  %v603 = vadd.f32 %v601, %v602
  %v604 = vrot.slane %v603, 4
  %v605 = vadd.f32 %v603, %v604
  %v606 = vrot.slane %v605, 2
  %v607 = vadd.f32 %v605, %v606
  %v608 = vrot.slane %v607, 1
  %v609 = vadd.f32 %v607, %v608
  %v610 = vmul.f32 %v609, %v153
  %v611 = vadd.f32 %v610, 0.0001
  %v612 = vrsqrt.pop %v611
  %v613 = vmul.f32 %v573, %v612
  %v614 = vmul.f32 %v574, %v612
  %v615 = vmul.f32 %v575, %v612
  %v616 = vmul.f32 %v576, %v612
  %v617 = vmul.f32 %v577, %v612
  %v618 = vmul.f32 %v578, %v612
  %v619 = vmul.f32 %v579, %v612
  %v620 = vmul.f32 %v580, %v612
  %v621 = vld [vmem:[%s8] sm:$0x1]
  %v623 = vlaneseq
  %v624 = vshrl.u32 %v623, 7
  %v625 = vsub.s32 0, %v624
  %v626 = vrot.slane %v621, %v625
  %v628 = vmul.f32 %v613, %v626
  %v629 = vmul.f32 %v614, %v626
  %v630 = vmul.f32 %v615, %v626
  %v631 = vmul.f32 %v616, %v626
  %v632 = vmul.f32 %v617, %v626
  %v633 = vmul.f32 %v618, %v626
  %v634 = vmul.f32 %v619, %v626
  %v635 = vmul.f32 %v620, %v626
  %v636 = vld [vmem:[%s9] sm:$0x1]
  %v638 = vlaneseq
  %v639 = vshrl.u32 %v638, 7
  %v640 = vsub.s32 0, %v639
  %v641 = vrot.slane %v636, %v640
  %v643 = vadd.f32 %v628, %v641
  %v644 = vadd.f32 %v629, %v641
  %v645 = vadd.f32 %v630, %v641
  %v646 = vadd.f32 %v631, %v641
  %v647 = vadd.f32 %v632, %v641
  %v648 = vadd.f32 %v633, %v641
  %v649 = vadd.f32 %v634, %v641
  %v650 = vadd.f32 %v635, %v641
  %v651 = vmax.f32 %v643, 0.0
  %v652 = vmax.f32 %v644, 0.0
  %v653 = vmax.f32 %v645, 0.0
  %v654 = vmax.f32 %v646, 0.0
  %v655 = vmax.f32 %v647, 0.0
  %v656 = vmax.f32 %v648, 0.0
  %v657 = vmax.f32 %v649, 0.0
  %v658 = vmax.f32 %v650, 0.0
  %659 = vst.msk [vmem:[%s10] sm:$0xff] %vm131, %v651
  %660 = vst.msk [vmem:[%s10 + $0x8] sm:$0xff] %vm131, %v652
  %661 = vst.msk [vmem:[%s10 + $0x10] sm:$0xff] %vm131, %v653
  %662 = vst.msk [vmem:[%s10 + $0x18] sm:$0xff] %vm131, %v654
  %663 = vst.msk [vmem:[%s10 + $0x20] sm:$0xff] %vm131, %v655
  %664 = vst.msk [vmem:[%s10 + $0x28] sm:$0xff] %vm131, %v656
  %665 = vst.msk [vmem:[%s10 + $0x30] sm:$0xff] %vm131, %v657
  %666 = vst.msk [vmem:[%s10 + $0x38] sm:$0xff] %vm131, %v658
  // Predicated region
  $region42: #{spformer_forward.5} parent=0 // pred_check
    _
  $region43: #{spformer_forward.5} parent=0 // pred_check_branch
    %668 = sbr.rel (0) target = $region45
  $region44: #{spformer_forward.5} parent=0 // pred_region
    _
  $region45: #{spformer_forward.5} parent=0 // pred_fallthru
    _
  // Predicated region
  $region46: #{spformer_forward.5} parent=0 // pred_check
    _
  $region47: #{spformer_forward.5} parent=0 // pred_check_branch
    %670 = sbr.rel (0) target = $region49
  $region48: #{spformer_forward.5} parent=0 // pred_region
    _
  $region49: #{spformer_forward.5} parent=0 // pred_fallthru
    _

// kernel: spformer_forward.4
$region0: #{spformer_forward.4}
  #allocation0 [shape = 'u32[]', space=smem, size = 0x4, offset = 0x4, fixed_abs, tag = 'smem constant byte address 0x4 - core index']
  #allocation1 [shape = 'u32[144,128]{1,0:T(1,128)}', space=vmem, size = 0x12000, scoped, tag = 'internal scratch']
  #allocation2 [shape = 'f32[64,128]{1,0:T(8,128)}', space=vmem, size = 0x8000, scoped, tag = 'scratch operand']
  %s0 = inlined_call_operand.vmem [shape: s32[1,256], index: 0, kind: input, shape index: {}]
  %s1 = inlined_call_operand.vmem [shape: bf16[256,128], index: 1, kind: input, shape index: {}]
  %s2 = inlined_call_operand.vmem [shape: f32[64,128], index: 2, kind: output, shape index: {}]
  %s3 = sld [smem:[#allocation0]]
  $region26: #{spformer_forward.4} parent=0
    _
  %s5 = ssub.s32 1, %s3
  %s6 = scalar_select 0, %s5, %s3
  // Predicated region
  $region2: #{spformer_forward.4} parent=0 // pred_check
    _
  $region3: #{spformer_forward.4} parent=0 // pred_check_branch
    %8 = sbr.rel (0) target = $region5
  $region4: #{spformer_forward.4} parent=0 // pred_region
    _
  $region5: #{spformer_forward.4} parent=0 // pred_fallthru
    _
  // Predicated region
  $region6: #{spformer_forward.4} parent=0 // pred_check
    _
  $region7: #{spformer_forward.4} parent=0 // pred_check_branch
    %10 = sbr.rel (0) target = $region9
  $region8: #{spformer_forward.4} parent=0 // pred_region
    _
  $region9: #{spformer_forward.4} parent=0 // pred_fallthru
    _
  %p12 = scmp.eq.s32.totalorder 0, 0
  // Predicated region
  $region10: #{spformer_forward.4} parent=0 // pred_check
    %p13 = pneg %p12
  $region11: #{spformer_forward.4} parent=0 // pred_check_branch
    %15 = sbr.rel (%p13) target = $region13
  $region12: #{spformer_forward.4} parent=0 // pred_region
    %16 = vst [vmem:[#allocation2] sm:$0xff] 0.0
    %17 = vst [vmem:[#allocation2 + $0x8] sm:$0xff] 0.0
    %18 = vst [vmem:[#allocation2 + $0x10] sm:$0xff] 0.0
    %19 = vst [vmem:[#allocation2 + $0x18] sm:$0xff] 0.0
    %20 = vst [vmem:[#allocation2 + $0x20] sm:$0xff] 0.0
    %21 = vst [vmem:[#allocation2 + $0x28] sm:$0xff] 0.0
    %22 = vst [vmem:[#allocation2 + $0x30] sm:$0xff] 0.0
    %23 = vst [vmem:[#allocation2 + $0x38] sm:$0xff] 0.0
  $region13: #{spformer_forward.4} parent=0 // pred_fallthru
    _
  %v24 = vld [vmem:[%s0] sm:$0x3]
  %v25 = vld [vmem:[%s1] sm:$0xf]
  %v26 = vld [vmem:[%s1 + $0x4] sm:$0xf]
  %v27 = vld [vmem:[%s1 + $0x8] sm:$0xf]
  %v28 = vld [vmem:[%s1 + $0xc] sm:$0xf]
  %v29 = vld [vmem:[%s1 + $0x10] sm:$0xf]
  %v30 = vld [vmem:[%s1 + $0x14] sm:$0xf]
  %v31 = vld [vmem:[%s1 + $0x18] sm:$0xf]
  %v32 = vld [vmem:[%s1 + $0x1c] sm:$0xf]
  %v33 = vld [vmem:[%s1 + $0x20] sm:$0xf]
  %v34 = vld [vmem:[%s1 + $0x24] sm:$0xf]
  %v35 = vld [vmem:[%s1 + $0x28] sm:$0xf]
  %v36 = vld [vmem:[%s1 + $0x2c] sm:$0xf]
  %v37 = vld [vmem:[%s1 + $0x30] sm:$0xf]
  %v38 = vld [vmem:[%s1 + $0x34] sm:$0xf]
  %v39 = vld [vmem:[%s1 + $0x38] sm:$0xf]
  %v40 = vld [vmem:[%s1 + $0x3c] sm:$0xf]
  %v41 = vld [vmem:[%s1 + $0x40] sm:$0xf]
  %v42 = vld [vmem:[%s1 + $0x44] sm:$0xf]
  %v43 = vld [vmem:[%s1 + $0x48] sm:$0xf]
  %v44 = vld [vmem:[%s1 + $0x4c] sm:$0xf]
  %v45 = vld [vmem:[%s1 + $0x50] sm:$0xf]
  %v46 = vld [vmem:[%s1 + $0x54] sm:$0xf]
  %v47 = vld [vmem:[%s1 + $0x58] sm:$0xf]
  %v48 = vld [vmem:[%s1 + $0x5c] sm:$0xf]
  %v49 = vld [vmem:[%s1 + $0x60] sm:$0xf]
  %v50 = vld [vmem:[%s1 + $0x64] sm:$0xf]
  %v51 = vld [vmem:[%s1 + $0x68] sm:$0xf]
  %v52 = vld [vmem:[%s1 + $0x6c] sm:$0xf]
  %v53 = vld [vmem:[%s1 + $0x70] sm:$0xf]
  %v54 = vld [vmem:[%s1 + $0x74] sm:$0xf]
  %v55 = vld [vmem:[%s1 + $0x78] sm:$0xf]
  %v56 = vld [vmem:[%s1 + $0x7c] sm:$0xf]
  %s57 = smul.u32 0, 64
  %v58 = vlaneseq
  %v59 = vshrl.u32 %v58, 7
  %v60 = vadd.s32 %v59, 8
  %v61 = vadd.s32 %v59, 16
  %v62 = vadd.s32 %v59, 24
  %v63 = vadd.s32 %v59, 32
  %v64 = vadd.s32 %v59, 40
  %v65 = vadd.s32 %v59, 48
  %v66 = vadd.s32 %v59, 56
  %v67 = vstv %s57
  %v68 = vadd.s32 %v59, %v67
  %v69 = vadd.s32 %v60, %v67
  %v70 = vadd.s32 %v61, %v67
  %v71 = vadd.s32 %v62, %v67
  %v72 = vadd.s32 %v63, %v67
  %v73 = vadd.s32 %v64, %v67
  %v74 = vadd.s32 %v65, %v67
  %v75 = vadd.s32 %v66, %v67
  %v76 = vlaneseq
  %v77 = vshrl.u32 %v76, 7
  %v78 = vsub.s32 0, %v77
  %v79 = vrot.slane %v24, %v78
  %v80 = vlaneseq
  %v81 = vshrl.u32 %v80, 7
  %v82 = vsub.s32 1, %v81
  %v83 = vrot.slane %v24, %v82
  %vm84 = vcmp.eq.s32.totalorder %v68, %v79
  %vm85 = vcmp.eq.s32.totalorder %v68, %v83
  %vm86 = vcmp.eq.s32.totalorder %v69, %v79
  %vm87 = vcmp.eq.s32.totalorder %v69, %v83
  %vm88 = vcmp.eq.s32.totalorder %v70, %v79
  %vm89 = vcmp.eq.s32.totalorder %v70, %v83
  %vm90 = vcmp.eq.s32.totalorder %v71, %v79
  %vm91 = vcmp.eq.s32.totalorder %v71, %v83
  %vm92 = vcmp.eq.s32.totalorder %v72, %v79
  %vm93 = vcmp.eq.s32.totalorder %v72, %v83
  %vm94 = vcmp.eq.s32.totalorder %v73, %v79
  %vm95 = vcmp.eq.s32.totalorder %v73, %v83
  %vm96 = vcmp.eq.s32.totalorder %v74, %v79
  %vm97 = vcmp.eq.s32.totalorder %v74, %v83
  %vm98 = vcmp.eq.s32.totalorder %v75, %v79
  %vm99 = vcmp.eq.s32.totalorder %v75, %v83
  %v100 = vsel %vm84, 1, 0
  %v101 = vsel %vm85, 1, 0
  %v102 = vsel %vm86, 1, 0
  %v103 = vsel %vm87, 1, 0
  %v104 = vsel %vm88, 1, 0
  %v105 = vsel %vm89, 1, 0
  %v106 = vsel %vm90, 1, 0
  %v107 = vsel %vm91, 1, 0
  %v108 = vsel %vm92, 1, 0
  %v109 = vsel %vm93, 1, 0
  %v110 = vsel %vm94, 1, 0
  %v111 = vsel %vm95, 1, 0
  %v112 = vsel %vm96, 1, 0
  %v113 = vsel %vm97, 1, 0
  %v114 = vsel %vm98, 1, 0
  %v115 = vsel %vm99, 1, 0
  %v116 = vcvt.s32.f32 %v100
  %v117 = vcvt.s32.f32 %v101
  %v118 = vcvt.s32.f32 %v102
  %v119 = vcvt.s32.f32 %v103
  %v120 = vcvt.s32.f32 %v104
  %v121 = vcvt.s32.f32 %v105
  %v122 = vcvt.s32.f32 %v106
  %v123 = vcvt.s32.f32 %v107
  %v124 = vcvt.s32.f32 %v108
  %v125 = vcvt.s32.f32 %v109
  %v126 = vcvt.s32.f32 %v110
  %v127 = vcvt.s32.f32 %v111
  %v128 = vcvt.s32.f32 %v112
  %v129 = vcvt.s32.f32 %v113
  %v130 = vcvt.s32.f32 %v114
  %v131 = vcvt.s32.f32 %v115
  %v132 = vpack.c.bf16 %v118, %v116
  %v133 = vpack.c.bf16 %v119, %v117
  %v134 = vpack.c.bf16 %v122, %v120
  %v135 = vpack.c.bf16 %v123, %v121
  %v136 = vpack.c.bf16 %v126, %v124
  %v137 = vpack.c.bf16 %v127, %v125
  %v138 = vpack.c.bf16 %v130, %v128
  %v139 = vpack.c.bf16 %v131, %v129
  %v140 = vld [vmem:[#allocation2] sm:$0xff]
  %v141 = vld [vmem:[#allocation2 + $0x8] sm:$0xff]
  %v142 = vld [vmem:[#allocation2 + $0x10] sm:$0xff]
  %v143 = vld [vmem:[#allocation2 + $0x18] sm:$0xff]
  %v144 = vld [vmem:[#allocation2 + $0x20] sm:$0xff]
  %v145 = vld [vmem:[#allocation2 + $0x28] sm:$0xff]
  %v146 = vld [vmem:[#allocation2 + $0x30] sm:$0xff]
  %v147 = vld [vmem:[#allocation2 + $0x38] sm:$0xff]
  %v180 = vunpack.c.l.b16 %v25
  %v181 = vunpack.c.l.b16 %v26
  %v182 = vunpack.c.l.b16 %v27
  %v183 = vunpack.c.l.b16 %v28
  %v184 = vunpack.c.l.b16 %v29
  %v185 = vunpack.c.l.b16 %v30
  %v186 = vunpack.c.l.b16 %v31
  %v187 = vunpack.c.l.b16 %v32
  %v188 = vunpack.c.l.b16 %v33
  %v189 = vunpack.c.l.b16 %v34
  %v190 = vunpack.c.l.b16 %v35
  %v191 = vunpack.c.l.b16 %v36
  %v192 = vunpack.c.l.b16 %v37
  %v193 = vunpack.c.l.b16 %v38
  %v194 = vunpack.c.l.b16 %v39
  %v195 = vunpack.c.l.b16 %v40
  %v196 = vunpack.c.l.b16 %v41
  %v197 = vunpack.c.l.b16 %v42
  %v198 = vunpack.c.l.b16 %v43
  %v199 = vunpack.c.l.b16 %v44
  %v200 = vunpack.c.l.b16 %v45
  %v201 = vunpack.c.l.b16 %v46
  %v202 = vunpack.c.l.b16 %v47
  %v203 = vunpack.c.l.b16 %v48
  %v204 = vunpack.c.l.b16 %v49
  %v205 = vunpack.c.l.b16 %v50
  %v206 = vunpack.c.l.b16 %v51
  %v207 = vunpack.c.l.b16 %v52
  %v208 = vunpack.c.l.b16 %v53
  %v209 = vunpack.c.l.b16 %v54
  %v210 = vunpack.c.l.b16 %v55
  %v211 = vunpack.c.l.b16 %v56
  %v212 = vpack.c.b16 %v181, %v180
  %v213 = vpack.c.b16 %v183, %v182
  %v214 = vpack.c.b16 %v185, %v184
  %v215 = vpack.c.b16 %v187, %v186
  %v216 = vpack.c.b16 %v189, %v188
  %v217 = vpack.c.b16 %v191, %v190
  %v218 = vpack.c.b16 %v193, %v192
  %v219 = vpack.c.b16 %v195, %v194
  %v220 = vpack.c.b16 %v197, %v196
  %v221 = vpack.c.b16 %v199, %v198
  %v222 = vpack.c.b16 %v201, %v200
  %v223 = vpack.c.b16 %v203, %v202
  %v224 = vpack.c.b16 %v205, %v204
  %v225 = vpack.c.b16 %v207, %v206
  %v226 = vpack.c.b16 %v209, %v208
  %v227 = vpack.c.b16 %v211, %v210
  %244 = vmatprep.subr.bf16.mxu0 0
  %245 = vmatpush1.bf16.msra.mxu0 %v212
  %246 = vmatprep.subr.bf16.mxu0 0
  %247 = vmatpush1.bf16.msra.mxu0 %v213
  %248 = vmatprep.subr.bf16.mxu0 0
  %249 = vmatpush1.bf16.msra.mxu0 %v214
  %250 = vmatprep.subr.bf16.mxu0 0
  %251 = vmatpush1.bf16.msra.mxu0 %v215
  %252 = vmatprep.subr.bf16.mxu0 0
  %253 = vmatpush1.bf16.msra.mxu0 %v216
  %254 = vmatprep.subr.bf16.mxu0 0
  %255 = vmatpush1.bf16.msra.mxu0 %v217
  %256 = vmatprep.subr.bf16.mxu0 0
  %257 = vmatpush1.bf16.msra.mxu0 %v218
  %258 = vmatprep.subr.bf16.mxu0 0
  %259 = vmatpush1.bf16.msra.mxu0 %v219
  %260 = vmatprep.subr.bf16.mxu0 0
  %261 = vmatpush1.bf16.msra.mxu0 %v220
  %262 = vmatprep.subr.bf16.mxu0 0
  %263 = vmatpush1.bf16.msra.mxu0 %v221
  %264 = vmatprep.subr.bf16.mxu0 0
  %265 = vmatpush1.bf16.msra.mxu0 %v222
  %266 = vmatprep.subr.bf16.mxu0 0
  %267 = vmatpush1.bf16.msra.mxu0 %v223
  %268 = vmatprep.subr.bf16.mxu0 0
  %269 = vmatpush1.bf16.msra.mxu0 %v224
  %270 = vmatprep.subr.bf16.mxu0 0
  %271 = vmatpush1.bf16.msra.mxu0 %v225
  %272 = vmatprep.subr.bf16.mxu0 0
  %273 = vmatpush1.bf16.msra.mxu0 %v226
  %274 = vmatprep.subr.bf16.mxu0 0
  %275 = vmatpush1.bf16.msra.mxu0 %v227
  %276 = vmatprep.mubr.bf16.mxu0 %v133
  %277 = vmatmul.mubr.bf16.gmra.mrb[0].mxu0 %v132
  %v278 = vpop.f32.mrb[0].mxu0
  %v279 = vadd.f32 0.0, %v278
  %v280 = vpop.f32.mrb[0].mxu0
  %v281 = vpop.f32.mrb[0].mxu0
  %v282 = vadd.f32 0.0, %v281
  %v283 = vpop.f32.mrb[0].mxu0
  %284 = vmatprep.mubr.bf16.mxu0 %v135
  %285 = vmatmul.mubr.bf16.gmra.mrb[0].mxu0 %v134
  %v286 = vpop.f32.mrb[0].mxu0
  %v287 = vadd.f32 0.0, %v286
  %v288 = vpop.f32.mrb[0].mxu0
  %v289 = vpop.f32.mrb[0].mxu0
  %v290 = vadd.f32 0.0, %v289
  %v291 = vpop.f32.mrb[0].mxu0
  %292 = vmatprep.mubr.bf16.mxu0 %v137
  %293 = vmatmul.mubr.bf16.gmra.mrb[0].mxu0 %v136
  %v294 = vpop.f32.mrb[0].mxu0
  %v295 = vadd.f32 0.0, %v294
  %v296 = vpop.f32.mrb[0].mxu0
  %v297 = vpop.f32.mrb[0].mxu0
  %v298 = vadd.f32 0.0, %v297
  %v299 = vpop.f32.mrb[0].mxu0
  %300 = vmatprep.mubr.bf16.mxu0 %v139
  %301 = vmatmul.mubr.bf16.gmra.mrb[0].mxu0 %v138
  %v302 = vpop.f32.mrb[0].mxu0
  %v303 = vadd.f32 0.0, %v302
  %v304 = vpop.f32.mrb[0].mxu0
  %v305 = vpop.f32.mrb[0].mxu0
  %v306 = vadd.f32 0.0, %v305
  %v307 = vpop.f32.mrb[0].mxu0
  %308 = vdwg.mxu0
  %v309 = vadd.f32 %v140, %v279
  %v310 = vadd.f32 %v141, %v282
  %v311 = vadd.f32 %v142, %v287
  %v312 = vadd.f32 %v143, %v290
  %v313 = vadd.f32 %v144, %v295
  %v314 = vadd.f32 %v145, %v298
  %v315 = vadd.f32 %v146, %v303
  %v316 = vadd.f32 %v147, %v306
  %317 = vst [vmem:[#allocation2] sm:$0xff] %v309
  %318 = vst [vmem:[#allocation2 + $0x8] sm:$0xff] %v310
  %319 = vst [vmem:[#allocation2 + $0x10] sm:$0xff] %v311
  %320 = vst [vmem:[#allocation2 + $0x18] sm:$0xff] %v312
  %321 = vst [vmem:[#allocation2 + $0x20] sm:$0xff] %v313
  %322 = vst [vmem:[#allocation2 + $0x28] sm:$0xff] %v314
  %323 = vst [vmem:[#allocation2 + $0x30] sm:$0xff] %v315
  %324 = vst [vmem:[#allocation2 + $0x38] sm:$0xff] %v316
  // Predicated region
  $region14: #{spformer_forward.4} parent=0 // pred_check
    %p325 = pneg %p12
  $region15: #{spformer_forward.4} parent=0 // pred_check_branch
    %327 = sbr.rel (%p325) target = $region17
  $region16: #{spformer_forward.4} parent=0 // pred_region
    %v328 = vld [vmem:[#allocation2] sm:$0xff]
    %v329 = vld [vmem:[#allocation2 + $0x8] sm:$0xff]
    %v330 = vld [vmem:[#allocation2 + $0x10] sm:$0xff]
    %v331 = vld [vmem:[#allocation2 + $0x18] sm:$0xff]
    %v332 = vld [vmem:[#allocation2 + $0x20] sm:$0xff]
    %v333 = vld [vmem:[#allocation2 + $0x28] sm:$0xff]
    %v334 = vld [vmem:[#allocation2 + $0x30] sm:$0xff]
    %v335 = vld [vmem:[#allocation2 + $0x38] sm:$0xff]
    %v336 = vmax.f32 %v328, 1.0
    %v337 = vmax.f32 %v329, 1.0
    %v338 = vmax.f32 %v330, 1.0
    %v339 = vmax.f32 %v331, 1.0
    %v340 = vmax.f32 %v332, 1.0
    %v341 = vmax.f32 %v333, 1.0
    %v342 = vmax.f32 %v334, 1.0
    %v343 = vmax.f32 %v335, 1.0
    %v344 = vrcp.pop %v336
    %v345 = vrcp.pop %v337
    %v346 = vrcp.pop %v338
    %v347 = vrcp.pop %v339
    %v348 = vrcp.pop %v340
    %v349 = vrcp.pop %v341
    %v350 = vrcp.pop %v342
    %v351 = vrcp.pop %v343
    %353 = vset.pattern.permute.xlu0 127
    %354 = vperm.xlu0 %353, %v344
    %v355 = vpop.permute.xlu0 %354
    %358 = vset.pattern.permute.xlu0 127
    %359 = vperm.xlu0 %358, %v345
    %v360 = vpop.permute.xlu0 %359
    %363 = vset.pattern.permute.xlu0 127
    %364 = vperm.xlu0 %363, %v346
    %v365 = vpop.permute.xlu0 %364
    %368 = vset.pattern.permute.xlu0 127
    %369 = vperm.xlu0 %368, %v347
    %v370 = vpop.permute.xlu0 %369
    %373 = vset.pattern.permute.xlu0 127
    %374 = vperm.xlu0 %373, %v348
    %v375 = vpop.permute.xlu0 %374
    %378 = vset.pattern.permute.xlu0 127
    %379 = vperm.xlu0 %378, %v349
    %v380 = vpop.permute.xlu0 %379
    %383 = vset.pattern.permute.xlu0 127
    %384 = vperm.xlu0 %383, %v350
    %v385 = vpop.permute.xlu0 %384
    %388 = vset.pattern.permute.xlu0 127
    %389 = vperm.xlu0 %388, %v351
    %v390 = vpop.permute.xlu0 %389
    %v392 = vmul.f32 %v328, %v355
    %v393 = vmul.f32 %v329, %v360
    %v394 = vmul.f32 %v330, %v365
    %v395 = vmul.f32 %v331, %v370
    %v396 = vmul.f32 %v332, %v375
    %v397 = vmul.f32 %v333, %v380
    %v398 = vmul.f32 %v334, %v385
    %v399 = vmul.f32 %v335, %v390
    %400 = vst [vmem:[%s2] sm:$0xff] %v392
    %401 = vst [vmem:[%s2 + $0x8] sm:$0xff] %v393
    %402 = vst [vmem:[%s2 + $0x10] sm:$0xff] %v394
    %403 = vst [vmem:[%s2 + $0x18] sm:$0xff] %v395
    %404 = vst [vmem:[%s2 + $0x20] sm:$0xff] %v396
    %405 = vst [vmem:[%s2 + $0x28] sm:$0xff] %v397
    %406 = vst [vmem:[%s2 + $0x30] sm:$0xff] %v398
    %407 = vst [vmem:[%s2 + $0x38] sm:$0xff] %v399
  $region17: #{spformer_forward.4} parent=0 // pred_fallthru
    _
  // Predicated region
  $region18: #{spformer_forward.4} parent=0 // pred_check
    _
  $region19: #{spformer_forward.4} parent=0 // pred_check_branch
    %409 = sbr.rel (0) target = $region21
  $region20: #{spformer_forward.4} parent=0 // pred_region
    _
  $region21: #{spformer_forward.4} parent=0 // pred_fallthru
    _
  // Predicated region
  $region22: #{spformer_forward.4} parent=0 // pred_check
    _
  $region23: #{spformer_forward.4} parent=0 // pred_check_branch
    %411 = sbr.rel (0) target = $region25
  $region24: #{spformer_forward.4} parent=0 // pred_region
    _
  $region25: #{spformer_forward.4} parent=0 // pred_fallthru
    _

// kernel: spformer_forward.6
$region0: #{spformer_forward.6}
  #allocation0 [shape = 'u32[]', space=smem, size = 0x4, offset = 0x4, fixed_abs, tag = 'smem constant byte address 0x4 - core index']
  #allocation1 [shape = 'u32[144,128]{1,0:T(1,128)}', space=vmem, size = 0x12000, scoped, tag = 'internal scratch']
  #allocation2 [shape = 'f32[16,128]{1,0:T(8,128)}', space=vmem, size = 0x2000, scoped, tag = 'scratch operand']
  %s0 = inlined_call_operand.vmem [shape: s32[1,256], index: 0, kind: input, shape index: {}]
  %s1 = inlined_call_operand.vmem [shape: bf16[256,128], index: 1, kind: input, shape index: {}]
  %s2 = inlined_call_operand.vmem [shape: f32[16,128], index: 2, kind: output, shape index: {}]
  %s3 = sld [smem:[#allocation0]]
  $region26: #{spformer_forward.6} parent=0
    _
  %s5 = ssub.s32 1, %s3
  %s6 = scalar_select 0, %s5, %s3
  // Predicated region
  $region2: #{spformer_forward.6} parent=0 // pred_check
    _
  $region3: #{spformer_forward.6} parent=0 // pred_check_branch
    %8 = sbr.rel (0) target = $region5
  $region4: #{spformer_forward.6} parent=0 // pred_region
    _
  $region5: #{spformer_forward.6} parent=0 // pred_fallthru
    _
  // Predicated region
  $region6: #{spformer_forward.6} parent=0 // pred_check
    _
  $region7: #{spformer_forward.6} parent=0 // pred_check_branch
    %10 = sbr.rel (0) target = $region9
  $region8: #{spformer_forward.6} parent=0 // pred_region
    _
  $region9: #{spformer_forward.6} parent=0 // pred_fallthru
    _
  %p12 = scmp.eq.s32.totalorder 0, 0
  // Predicated region
  $region10: #{spformer_forward.6} parent=0 // pred_check
    %p13 = pneg %p12
  $region11: #{spformer_forward.6} parent=0 // pred_check_branch
    %15 = sbr.rel (%p13) target = $region13
  $region12: #{spformer_forward.6} parent=0 // pred_region
    %16 = vst [vmem:[#allocation2] sm:$0xff] 0.0
    %17 = vst [vmem:[#allocation2 + $0x8] sm:$0xff] 0.0
  $region13: #{spformer_forward.6} parent=0 // pred_fallthru
    _
  %v18 = vld [vmem:[%s0] sm:$0x3]
  %v19 = vld [vmem:[%s1] sm:$0xf]
  %v20 = vld [vmem:[%s1 + $0x4] sm:$0xf]
  %v21 = vld [vmem:[%s1 + $0x8] sm:$0xf]
  %v22 = vld [vmem:[%s1 + $0xc] sm:$0xf]
  %v23 = vld [vmem:[%s1 + $0x10] sm:$0xf]
  %v24 = vld [vmem:[%s1 + $0x14] sm:$0xf]
  %v25 = vld [vmem:[%s1 + $0x18] sm:$0xf]
  %v26 = vld [vmem:[%s1 + $0x1c] sm:$0xf]
  %v27 = vld [vmem:[%s1 + $0x20] sm:$0xf]
  %v28 = vld [vmem:[%s1 + $0x24] sm:$0xf]
  %v29 = vld [vmem:[%s1 + $0x28] sm:$0xf]
  %v30 = vld [vmem:[%s1 + $0x2c] sm:$0xf]
  %v31 = vld [vmem:[%s1 + $0x30] sm:$0xf]
  %v32 = vld [vmem:[%s1 + $0x34] sm:$0xf]
  %v33 = vld [vmem:[%s1 + $0x38] sm:$0xf]
  %v34 = vld [vmem:[%s1 + $0x3c] sm:$0xf]
  %v35 = vld [vmem:[%s1 + $0x40] sm:$0xf]
  %v36 = vld [vmem:[%s1 + $0x44] sm:$0xf]
  %v37 = vld [vmem:[%s1 + $0x48] sm:$0xf]
  %v38 = vld [vmem:[%s1 + $0x4c] sm:$0xf]
  %v39 = vld [vmem:[%s1 + $0x50] sm:$0xf]
  %v40 = vld [vmem:[%s1 + $0x54] sm:$0xf]
  %v41 = vld [vmem:[%s1 + $0x58] sm:$0xf]
  %v42 = vld [vmem:[%s1 + $0x5c] sm:$0xf]
  %v43 = vld [vmem:[%s1 + $0x60] sm:$0xf]
  %v44 = vld [vmem:[%s1 + $0x64] sm:$0xf]
  %v45 = vld [vmem:[%s1 + $0x68] sm:$0xf]
  %v46 = vld [vmem:[%s1 + $0x6c] sm:$0xf]
  %v47 = vld [vmem:[%s1 + $0x70] sm:$0xf]
  %v48 = vld [vmem:[%s1 + $0x74] sm:$0xf]
  %v49 = vld [vmem:[%s1 + $0x78] sm:$0xf]
  %v50 = vld [vmem:[%s1 + $0x7c] sm:$0xf]
  %s51 = smul.u32 0, 16
  %v52 = vlaneseq
  %v53 = vshrl.u32 %v52, 7
  %v54 = vadd.s32 %v53, 8
  %v55 = vstv %s51
  %v56 = vadd.s32 %v53, %v55
  %v57 = vadd.s32 %v54, %v55
  %v58 = vlaneseq
  %v59 = vshrl.u32 %v58, 7
  %v60 = vsub.s32 0, %v59
  %v61 = vrot.slane %v18, %v60
  %v62 = vlaneseq
  %v63 = vshrl.u32 %v62, 7
  %v64 = vsub.s32 1, %v63
  %v65 = vrot.slane %v18, %v64
  %vm66 = vcmp.eq.s32.totalorder %v56, %v61
  %vm67 = vcmp.eq.s32.totalorder %v56, %v65
  %vm68 = vcmp.eq.s32.totalorder %v57, %v61
  %vm69 = vcmp.eq.s32.totalorder %v57, %v65
  %v70 = vsel %vm66, 1, 0
  %v71 = vsel %vm67, 1, 0
  %v72 = vsel %vm68, 1, 0
  %v73 = vsel %vm69, 1, 0
  %v74 = vcvt.s32.f32 %v70
  %v75 = vcvt.s32.f32 %v71
  %v76 = vcvt.s32.f32 %v72
  %v77 = vcvt.s32.f32 %v73
  %v78 = vpack.c.bf16 %v76, %v74
  %v79 = vpack.c.bf16 %v77, %v75
  %v80 = vld [vmem:[#allocation2] sm:$0xff]
  %v81 = vld [vmem:[#allocation2 + $0x8] sm:$0xff]
  %v114 = vunpack.c.l.b16 %v19
  %v115 = vunpack.c.l.b16 %v20
  %v116 = vunpack.c.l.b16 %v21
  %v117 = vunpack.c.l.b16 %v22
  %v118 = vunpack.c.l.b16 %v23
  %v119 = vunpack.c.l.b16 %v24
  %v120 = vunpack.c.l.b16 %v25
  %v121 = vunpack.c.l.b16 %v26
  %v122 = vunpack.c.l.b16 %v27
  %v123 = vunpack.c.l.b16 %v28
  %v124 = vunpack.c.l.b16 %v29
  %v125 = vunpack.c.l.b16 %v30
  %v126 = vunpack.c.l.b16 %v31
  %v127 = vunpack.c.l.b16 %v32
  %v128 = vunpack.c.l.b16 %v33
  %v129 = vunpack.c.l.b16 %v34
  %v130 = vunpack.c.l.b16 %v35
  %v131 = vunpack.c.l.b16 %v36
  %v132 = vunpack.c.l.b16 %v37
  %v133 = vunpack.c.l.b16 %v38
  %v134 = vunpack.c.l.b16 %v39
  %v135 = vunpack.c.l.b16 %v40
  %v136 = vunpack.c.l.b16 %v41
  %v137 = vunpack.c.l.b16 %v42
  %v138 = vunpack.c.l.b16 %v43
  %v139 = vunpack.c.l.b16 %v44
  %v140 = vunpack.c.l.b16 %v45
  %v141 = vunpack.c.l.b16 %v46
  %v142 = vunpack.c.l.b16 %v47
  %v143 = vunpack.c.l.b16 %v48
  %v144 = vunpack.c.l.b16 %v49
  %v145 = vunpack.c.l.b16 %v50
  %v146 = vpack.c.b16 %v115, %v114
  %v147 = vpack.c.b16 %v117, %v116
  %v148 = vpack.c.b16 %v119, %v118
  %v149 = vpack.c.b16 %v121, %v120
  %v150 = vpack.c.b16 %v123, %v122
  %v151 = vpack.c.b16 %v125, %v124
  %v152 = vpack.c.b16 %v127, %v126
  %v153 = vpack.c.b16 %v129, %v128
  %v154 = vpack.c.b16 %v131, %v130
  %v155 = vpack.c.b16 %v133, %v132
  %v156 = vpack.c.b16 %v135, %v134
  %v157 = vpack.c.b16 %v137, %v136
  %v158 = vpack.c.b16 %v139, %v138
  %v159 = vpack.c.b16 %v141, %v140
  %v160 = vpack.c.b16 %v143, %v142
  %v161 = vpack.c.b16 %v145, %v144
  %178 = vmatprep.subr.bf16.mxu0 0
  %179 = vmatpush1.bf16.msra.mxu0 %v146
  %180 = vmatprep.subr.bf16.mxu0 0
  %181 = vmatpush1.bf16.msra.mxu0 %v147
  %182 = vmatprep.subr.bf16.mxu0 0
  %183 = vmatpush1.bf16.msra.mxu0 %v148
  %184 = vmatprep.subr.bf16.mxu0 0
  %185 = vmatpush1.bf16.msra.mxu0 %v149
  %186 = vmatprep.subr.bf16.mxu0 0
  %187 = vmatpush1.bf16.msra.mxu0 %v150
  %188 = vmatprep.subr.bf16.mxu0 0
  %189 = vmatpush1.bf16.msra.mxu0 %v151
  %190 = vmatprep.subr.bf16.mxu0 0
  %191 = vmatpush1.bf16.msra.mxu0 %v152
  %192 = vmatprep.subr.bf16.mxu0 0
  %193 = vmatpush1.bf16.msra.mxu0 %v153
  %194 = vmatprep.subr.bf16.mxu0 0
  %195 = vmatpush1.bf16.msra.mxu0 %v154
  %196 = vmatprep.subr.bf16.mxu0 0
  %197 = vmatpush1.bf16.msra.mxu0 %v155
  %198 = vmatprep.subr.bf16.mxu0 0
  %199 = vmatpush1.bf16.msra.mxu0 %v156
  %200 = vmatprep.subr.bf16.mxu0 0
  %201 = vmatpush1.bf16.msra.mxu0 %v157
  %202 = vmatprep.subr.bf16.mxu0 0
  %203 = vmatpush1.bf16.msra.mxu0 %v158
  %204 = vmatprep.subr.bf16.mxu0 0
  %205 = vmatpush1.bf16.msra.mxu0 %v159
  %206 = vmatprep.subr.bf16.mxu0 0
  %207 = vmatpush1.bf16.msra.mxu0 %v160
  %208 = vmatprep.subr.bf16.mxu0 0
  %209 = vmatpush1.bf16.msra.mxu0 %v161
  %210 = vmatprep.mubr.bf16.mxu0 %v79
  %211 = vmatmul.mubr.bf16.gmra.mrb[0].mxu0 %v78
  %v212 = vpop.f32.mrb[0].mxu0
  %v213 = vadd.f32 0.0, %v212
  %v214 = vpop.f32.mrb[0].mxu0
  %v215 = vpop.f32.mrb[0].mxu0
  %v216 = vadd.f32 0.0, %v215
  %v217 = vpop.f32.mrb[0].mxu0
  %218 = vdwg.mxu0
  %v219 = vadd.f32 %v80, %v213
  %v220 = vadd.f32 %v81, %v216
  %221 = vst [vmem:[#allocation2] sm:$0xff] %v219
  %222 = vst [vmem:[#allocation2 + $0x8] sm:$0xff] %v220
  // Predicated region
  $region14: #{spformer_forward.6} parent=0 // pred_check
    %p223 = pneg %p12
  $region15: #{spformer_forward.6} parent=0 // pred_check_branch
    %225 = sbr.rel (%p223) target = $region17
  $region16: #{spformer_forward.6} parent=0 // pred_region
    %v226 = vld [vmem:[#allocation2] sm:$0xff]
    %v227 = vld [vmem:[#allocation2 + $0x8] sm:$0xff]
    %v228 = vmax.f32 %v226, 1.0
    %v229 = vmax.f32 %v227, 1.0
    %v230 = vrcp.pop %v228
    %v231 = vrcp.pop %v229
    %233 = vset.pattern.permute.xlu0 127
    %234 = vperm.xlu0 %233, %v230
    %v235 = vpop.permute.xlu0 %234
    %238 = vset.pattern.permute.xlu0 127
    %239 = vperm.xlu0 %238, %v231
    %v240 = vpop.permute.xlu0 %239
    %v242 = vmul.f32 %v226, %v235
    %v243 = vmul.f32 %v227, %v240
    %244 = vst [vmem:[%s2] sm:$0xff] %v242
    %245 = vst [vmem:[%s2 + $0x8] sm:$0xff] %v243
  $region17: #{spformer_forward.6} parent=0 // pred_fallthru
    _
  // Predicated region
  $region18: #{spformer_forward.6} parent=0 // pred_check
    _
  $region19: #{spformer_forward.6} parent=0 // pred_check_branch
    %247 = sbr.rel (0) target = $region21
  $region20: #{spformer_forward.6} parent=0 // pred_region
    _
  $region21: #{spformer_forward.6} parent=0 // pred_fallthru
    _
  // Predicated region
  $region22: #{spformer_forward.6} parent=0 // pred_check
    _
  $region23: #{spformer_forward.6} parent=0 // pred_check_branch
    %249 = sbr.rel (0) target = $region25
  $region24: #{spformer_forward.6} parent=0 // pred_region
    _
  $region25: #{spformer_forward.6} parent=0 // pred_fallthru
    _

// kernel: spformer_forward.7
$region0: #{spformer_forward.7}
  #allocation0 [shape = 'u32[]', space=smem, size = 0x4, offset = 0x4, fixed_abs, tag = 'smem constant byte address 0x4 - core index']
  #allocation1 [shape = 'u32[144,128]{1,0:T(1,128)}', space=vmem, size = 0x12000, scoped, tag = 'internal scratch']
  %s0 = inlined_call_operand.vmem [shape: f32[16,32], index: 0, kind: input, shape index: {}]
  %s1 = inlined_call_operand.vmem [shape: bf16[32,64], index: 1, kind: input, shape index: {}]
  %s2 = inlined_call_operand.vmem [shape: f32[1,64], index: 2, kind: input, shape index: {}]
  %s3 = inlined_call_operand.vmem [shape: f32[1,64], index: 3, kind: input, shape index: {}]
  %s4 = inlined_call_operand.vmem [shape: f32[1,64], index: 4, kind: input, shape index: {}]
  %s5 = inlined_call_operand.vmem [shape: bf16[64,64], index: 5, kind: input, shape index: {}]
  %s6 = inlined_call_operand.vmem [shape: f32[1,64], index: 6, kind: input, shape index: {}]
  %s7 = inlined_call_operand.vmem [shape: f32[1,64], index: 7, kind: input, shape index: {}]
  %s8 = inlined_call_operand.vmem [shape: f32[1,64], index: 8, kind: input, shape index: {}]
  %s9 = inlined_call_operand.vmem [shape: bf16[64,2], index: 9, kind: input, shape index: {}]
  %s10 = inlined_call_operand.vmem [shape: f32[1,2], index: 10, kind: input, shape index: {}]
  %s11 = inlined_call_operand.vmem [shape: f32[16,2], index: 11, kind: output, shape index: {}]
  %s12 = sld [smem:[#allocation0]]
  $region54: #{spformer_forward.7} parent=0
    _
  %s14 = ssub.s32 1, %s12
  %s15 = scalar_select 0, %s14, %s12
  // Predicated region
  $region2: #{spformer_forward.7} parent=0 // pred_check
    _
  $region3: #{spformer_forward.7} parent=0 // pred_check_branch
    %17 = sbr.rel (0) target = $region5
  $region4: #{spformer_forward.7} parent=0 // pred_region
    _
  $region5: #{spformer_forward.7} parent=0 // pred_fallthru
    _
  // Predicated region
  $region6: #{spformer_forward.7} parent=0 // pred_check
    _
  $region7: #{spformer_forward.7} parent=0 // pred_check_branch
    %19 = sbr.rel (0) target = $region9
  $region8: #{spformer_forward.7} parent=0 // pred_region
    _
  $region9: #{spformer_forward.7} parent=0 // pred_fallthru
    _
  // Predicated region
  $region10: #{spformer_forward.7} parent=0 // pred_check
    _
  $region11: #{spformer_forward.7} parent=0 // pred_check_branch
    %21 = sbr.rel (0) target = $region13
  $region12: #{spformer_forward.7} parent=0 // pred_region
    _
  $region13: #{spformer_forward.7} parent=0 // pred_fallthru
    _
  // Predicated region
  $region14: #{spformer_forward.7} parent=0 // pred_check
    _
  $region15: #{spformer_forward.7} parent=0 // pred_check_branch
    %23 = sbr.rel (0) target = $region17
  $region16: #{spformer_forward.7} parent=0 // pred_region
    _
  $region17: #{spformer_forward.7} parent=0 // pred_fallthru
    _
  // Predicated region
  $region18: #{spformer_forward.7} parent=0 // pred_check
    _
  $region19: #{spformer_forward.7} parent=0 // pred_check_branch
    %25 = sbr.rel (0) target = $region21
  $region20: #{spformer_forward.7} parent=0 // pred_region
    _
  $region21: #{spformer_forward.7} parent=0 // pred_fallthru
    _
  // Predicated region
  $region22: #{spformer_forward.7} parent=0 // pred_check
    _
  $region23: #{spformer_forward.7} parent=0 // pred_check_branch
    %27 = sbr.rel (0) target = $region25
  $region24: #{spformer_forward.7} parent=0 // pred_region
    _
  $region25: #{spformer_forward.7} parent=0 // pred_fallthru
    _
  // Predicated region
  $region26: #{spformer_forward.7} parent=0 // pred_check
    _
  $region27: #{spformer_forward.7} parent=0 // pred_check_branch
    %29 = sbr.rel (0) target = $region29
  $region28: #{spformer_forward.7} parent=0 // pred_region
    _
  $region29: #{spformer_forward.7} parent=0 // pred_fallthru
    _
  // Predicated region
  $region30: #{spformer_forward.7} parent=0 // pred_check
    _
  $region31: #{spformer_forward.7} parent=0 // pred_check_branch
    %31 = sbr.rel (0) target = $region33
  $region32: #{spformer_forward.7} parent=0 // pred_region
    _
  $region33: #{spformer_forward.7} parent=0 // pred_fallthru
    _
  // Predicated region
  $region34: #{spformer_forward.7} parent=0 // pred_check
    _
  $region35: #{spformer_forward.7} parent=0 // pred_check_branch
    %33 = sbr.rel (0) target = $region37
  $region36: #{spformer_forward.7} parent=0 // pred_region
    _
  $region37: #{spformer_forward.7} parent=0 // pred_fallthru
    _
  // Predicated region
  $region38: #{spformer_forward.7} parent=0 // pred_check
    _
  $region39: #{spformer_forward.7} parent=0 // pred_check_branch
    %35 = sbr.rel (0) target = $region41
  $region40: #{spformer_forward.7} parent=0 // pred_region
    _
  $region41: #{spformer_forward.7} parent=0 // pred_fallthru
    _
  // Predicated region
  $region42: #{spformer_forward.7} parent=0 // pred_check
    _
  $region43: #{spformer_forward.7} parent=0 // pred_check_branch
    %37 = sbr.rel (0) target = $region45
  $region44: #{spformer_forward.7} parent=0 // pred_region
    _
  $region45: #{spformer_forward.7} parent=0 // pred_fallthru
    _
  %v39 = vld [vmem:[%s0] sm:$0xff]
  %v40 = vld [vmem:[%s0 + $0x8] sm:$0xff]
  %v41 = vpack.c.bf16 %v40, %v39
  %v42 = vld [vmem:[%s1] sm:$0xf]
  %v43 = vld [vmem:[%s1 + $0x4] sm:$0xf]
  %v44 = vld [vmem:[%s1 + $0x8] sm:$0xf]
  %v45 = vld [vmem:[%s1 + $0xc] sm:$0xf]
  %v46 = vld [vmem:[%s2] sm:$0x1]
  %v48 = vlaneseq
  %v49 = vshrl.u32 %v48, 7
  %v50 = vsub.s32 0, %v49
  %v51 = vrot.slane %v46, %v50
  %v57 = vunpack.c.l.b16 %v42
  %v58 = vunpack.c.l.b16 %v43
  %v59 = vunpack.c.l.b16 %v44
  %v60 = vunpack.c.l.b16 %v45
  %v61 = vpack.c.b16 %v58, %v57
  %v62 = vpack.c.b16 %v60, %v59
  %vm65 = vcmask 261120
  %v67 = vsel %vm65, %v41, 0
  %69 = vmatprep.subr.bf16.mxu0 0
  %70 = vmatpush1.bf16.msra.mxu0 %v61
  %71 = vmatprep.subr.bf16.mxu0 0
  %72 = vmatpush1.bf16.msra.mxu0 %v62
  %73 = vmatprep.subr.bf16.mxu0 0
  %74 = vmatpush1.bf16.msra.mxu0 0
  %75 = vmatprep.subr.bf16.mxu0 0
  %76 = vmatpush1.bf16.msra.mxu0 0
  %77 = vmatprep.subr.bf16.mxu0 0
  %78 = vmatpush1.bf16.msra.mxu0 0
  %79 = vmatprep.subr.bf16.mxu0 0
  %80 = vmatpush1.bf16.msra.mxu0 0
  %81 = vmatprep.subr.bf16.mxu0 0
  %82 = vmatpush1.bf16.msra.mxu0 0
  %83 = vmatprep.subr.bf16.mxu0 0
  %84 = vmatpush1.bf16.msra.mxu0 0
  %85 = vmatprep.subr.bf16.mxu0 0
  %86 = vmatpush1.bf16.msra.mxu0 0
  %87 = vmatprep.subr.bf16.mxu0 0
  %88 = vmatpush1.bf16.msra.mxu0 0
  %89 = vmatprep.subr.bf16.mxu0 0
  %90 = vmatpush1.bf16.msra.mxu0 0
  %91 = vmatprep.subr.bf16.mxu0 0
  %92 = vmatpush1.bf16.msra.mxu0 0
  %93 = vmatprep.subr.bf16.mxu0 0
  %94 = vmatpush1.bf16.msra.mxu0 0
  %95 = vmatprep.subr.bf16.mxu0 0
  %96 = vmatpush1.bf16.msra.mxu0 0
  %97 = vmatprep.subr.bf16.mxu0 0
  %98 = vmatpush1.bf16.msra.mxu0 0
  %99 = vmatprep.subr.bf16.mxu0 0
  %100 = vmatpush1.bf16.msra.mxu0 0
  %101 = vmatprep.mubr.bf16.mxu0 0
  %102 = vmatmul.mubr.bf16.gmra.mrb[0].mxu0 %v67
  %v103 = vpop.f32.mrb[0].mxu0
  %v104 = vadd.f32 %v51, %v103
  %v105 = vpop.f32.mrb[0].mxu0
  %v106 = vpop.f32.mrb[0].mxu0
  %v107 = vadd.f32 %v51, %v106
  %v108 = vpop.f32.mrb[0].mxu0
  %109 = vdwg.mxu0
  %vm110 = vcmask 523264
  %v111 = vsel %vm110, %v104, 0.0
  %v112 = vsel %vm110, %v107, 0.0
  %v113 = vadd.f32 %v111, %v112
  %v114 = vrot.slane %v113, 4
  %v115 = vadd.f32 %v113, %v114
  %v116 = vrot.slane %v115, 2
  %v117 = vadd.f32 %v115, %v116
  %v118 = vrot.slane %v117, 1
  %v119 = vadd.f32 %v117, %v118
  %v120 = vrcp.pop 16.0
  %v121 = vmul.f32 %v119, %v120
  %v122 = vsub.f32 %v104, %v121
  %v123 = vsub.f32 %v107, %v121
  %v124 = vmul.f32 %v122, %v122
  %v125 = vmul.f32 %v123, %v123
  %v126 = vsel %vm110, %v124, 0.0
  %v127 = vsel %vm110, %v125, 0.0
  %v128 = vadd.f32 %v126, %v127
  %v129 = vrot.slane %v128, 4
  %v130 = vadd.f32 %v128, %v129
  %v131 = vrot.slane %v130, 2
  %v132 = vadd.f32 %v130, %v131
  %v133 = vrot.slane %v132, 1
  %v134 = vadd.f32 %v132, %v133
  %v135 = vmul.f32 %v134, %v120
  %v136 = vadd.f32 %v135, 0.0001
  %v137 = vrsqrt.pop %v136
  %v138 = vmul.f32 %v122, %v137
  %v139 = vmul.f32 %v123, %v137
  %v140 = vld [vmem:[%s3] sm:$0x1]
  %v142 = vlaneseq
  %v143 = vshrl.u32 %v142, 7
  %v144 = vsub.s32 0, %v143
  %v145 = vrot.slane %v140, %v144
  %v147 = vmul.f32 %v138, %v145
  %v148 = vmul.f32 %v139, %v145
  %v149 = vld [vmem:[%s4] sm:$0x1]
  %v151 = vlaneseq
  %v152 = vshrl.u32 %v151, 7
  %v153 = vsub.s32 0, %v152
  %v154 = vrot.slane %v149, %v153
  %v156 = vadd.f32 %v147, %v154
  %v157 = vadd.f32 %v148, %v154
  %v158 = vmax.f32 %v156, 0.0
  %v159 = vmax.f32 %v157, 0.0
  %v160 = vpack.c.bf16 %v159, %v158
  %v161 = vld [vmem:[%s5] sm:$0xf]
  %v162 = vld [vmem:[%s5 + $0x4] sm:$0xf]
  %v163 = vld [vmem:[%s5 + $0x8] sm:$0xf]
  %v164 = vld [vmem:[%s5 + $0xc] sm:$0xf]
  %v165 = vld [vmem:[%s5 + $0x10] sm:$0xf]
  %v166 = vld [vmem:[%s5 + $0x14] sm:$0xf]
  %v167 = vld [vmem:[%s5 + $0x18] sm:$0xf]
  %v168 = vld [vmem:[%s5 + $0x1c] sm:$0xf]
  %v169 = vld [vmem:[%s6] sm:$0x1]
  %v171 = vlaneseq
  %v172 = vshrl.u32 %v171, 7
  %v173 = vsub.s32 0, %v172
  %v174 = vrot.slane %v169, %v173
  %v184 = vunpack.c.l.b16 %v161
  %v185 = vunpack.c.l.b16 %v162
  %v186 = vunpack.c.l.b16 %v163
  %v187 = vunpack.c.l.b16 %v164
  %v188 = vunpack.c.l.b16 %v165
  %v189 = vunpack.c.l.b16 %v166
  %v190 = vunpack.c.l.b16 %v167
  %v191 = vunpack.c.l.b16 %v168
  %v192 = vpack.c.b16 %v185, %v184
  %v193 = vpack.c.b16 %v187, %v186
  %v194 = vpack.c.b16 %v189, %v188
  %v195 = vpack.c.b16 %v191, %v190
  %v201 = vsel %vm110, %v160, 0
  %203 = vmatprep.subr.bf16.mxu0 0
  %204 = vmatpush1.bf16.msra.mxu0 %v192
  %205 = vmatprep.subr.bf16.mxu0 0
  %206 = vmatpush1.bf16.msra.mxu0 %v193
  %207 = vmatprep.subr.bf16.mxu0 0
  %208 = vmatpush1.bf16.msra.mxu0 %v194
  %209 = vmatprep.subr.bf16.mxu0 0
  %210 = vmatpush1.bf16.msra.mxu0 %v195
  %211 = vmatprep.subr.bf16.mxu0 0
  %212 = vmatpush1.bf16.msra.mxu0 0
  %213 = vmatprep.subr.bf16.mxu0 0
  %214 = vmatpush1.bf16.msra.mxu0 0
  %215 = vmatprep.subr.bf16.mxu0 0
  %216 = vmatpush1.bf16.msra.mxu0 0
  %217 = vmatprep.subr.bf16.mxu0 0
  %218 = vmatpush1.bf16.msra.mxu0 0
  %219 = vmatprep.subr.bf16.mxu0 0
  %220 = vmatpush1.bf16.msra.mxu0 0
  %221 = vmatprep.subr.bf16.mxu0 0
  %222 = vmatpush1.bf16.msra.mxu0 0
  %223 = vmatprep.subr.bf16.mxu0 0
  %224 = vmatpush1.bf16.msra.mxu0 0
  %225 = vmatprep.subr.bf16.mxu0 0
  %226 = vmatpush1.bf16.msra.mxu0 0
  %227 = vmatprep.subr.bf16.mxu0 0
  %228 = vmatpush1.bf16.msra.mxu0 0
  %229 = vmatprep.subr.bf16.mxu0 0
  %230 = vmatpush1.bf16.msra.mxu0 0
  %231 = vmatprep.subr.bf16.mxu0 0
  %232 = vmatpush1.bf16.msra.mxu0 0
  %233 = vmatprep.subr.bf16.mxu0 0
  %234 = vmatpush1.bf16.msra.mxu0 0
  %235 = vmatprep.mubr.bf16.mxu0 0
  %236 = vmatmul.mubr.bf16.gmra.mrb[0].mxu0 %v201
  %v237 = vpop.f32.mrb[0].mxu0
  %v238 = vadd.f32 %v174, %v237
  %v239 = vpop.f32.mrb[0].mxu0
  %v240 = vpop.f32.mrb[0].mxu0
  %v241 = vadd.f32 %v174, %v240
  %v242 = vpop.f32.mrb[0].mxu0
  %243 = vdwg.mxu0
  %v244 = vsel %vm110, %v238, 0.0
  %v245 = vsel %vm110, %v241, 0.0
  %v246 = vadd.f32 %v244, %v245
  %v247 = vrot.slane %v246, 4
  %v248 = vadd.f32 %v246, %v247
  %v249 = vrot.slane %v248, 2
  %v250 = vadd.f32 %v248, %v249
  %v251 = vrot.slane %v250, 1
  %v252 = vadd.f32 %v250, %v251
  %v253 = vmul.f32 %v252, %v120
  %v254 = vsub.f32 %v238, %v253
  %v255 = vsub.f32 %v241, %v253
  %v256 = vmul.f32 %v254, %v254
  %v257 = vmul.f32 %v255, %v255
  %v258 = vsel %vm110, %v256, 0.0
  %v259 = vsel %vm110, %v257, 0.0
  %v260 = vadd.f32 %v258, %v259
  %v261 = vrot.slane %v260, 4
  %v262 = vadd.f32 %v260, %v261
  %v263 = vrot.slane %v262, 2
  %v264 = vadd.f32 %v262, %v263
  %v265 = vrot.slane %v264, 1
  %v266 = vadd.f32 %v264, %v265
  %v267 = vmul.f32 %v266, %v120
  %v268 = vadd.f32 %v267, 0.0001
  %v269 = vrsqrt.pop %v268
  %v270 = vmul.f32 %v254, %v269
  %v271 = vmul.f32 %v255, %v269
  %v272 = vld [vmem:[%s7] sm:$0x1]
  %v274 = vlaneseq
  %v275 = vshrl.u32 %v274, 7
  %v276 = vsub.s32 0, %v275
  %v277 = vrot.slane %v272, %v276
  %v279 = vmul.f32 %v270, %v277
  %v280 = vmul.f32 %v271, %v277
  %v281 = vld [vmem:[%s8] sm:$0x1]
  %v283 = vlaneseq
  %v284 = vshrl.u32 %v283, 7
  %v285 = vsub.s32 0, %v284
  %v286 = vrot.slane %v281, %v285
  %v288 = vadd.f32 %v279, %v286
  %v289 = vadd.f32 %v280, %v286
  %v290 = vmax.f32 %v288, 0.0
  %v291 = vmax.f32 %v289, 0.0
  %v292 = vpack.c.bf16 %v291, %v290
  %v293 = vld [vmem:[%s9] sm:$0xf]
  %v294 = vld [vmem:[%s9 + $0x4] sm:$0xf]
  %v295 = vld [vmem:[%s9 + $0x8] sm:$0xf]
  %v296 = vld [vmem:[%s9 + $0xc] sm:$0xf]
  %v297 = vld [vmem:[%s9 + $0x10] sm:$0xf]
  %v298 = vld [vmem:[%s9 + $0x14] sm:$0xf]
  %v299 = vld [vmem:[%s9 + $0x18] sm:$0xf]
  %v300 = vld [vmem:[%s9 + $0x1c] sm:$0xf]
  %v301 = vld [vmem:[%s10] sm:$0x1]
  %v303 = vlaneseq
  %v304 = vshrl.u32 %v303, 7
  %v305 = vsub.s32 0, %v304
  %v306 = vrot.slane %v301, %v305
  %v316 = vunpack.c.l.b16 %v293
  %v317 = vunpack.c.l.b16 %v294
  %v318 = vunpack.c.l.b16 %v295
  %v319 = vunpack.c.l.b16 %v296
  %v320 = vunpack.c.l.b16 %v297
  %v321 = vunpack.c.l.b16 %v298
  %v322 = vunpack.c.l.b16 %v299
  %v323 = vunpack.c.l.b16 %v300
  %v324 = vpack.c.b16 %v317, %v316
  %v325 = vpack.c.b16 %v319, %v318
  %v326 = vpack.c.b16 %v321, %v320
  %v327 = vpack.c.b16 %v323, %v322
  %v333 = vsel %vm110, %v292, 0
  %335 = vmatprep.subr.bf16.mxu0 0
  %336 = vmatpush1.bf16.msra.mxu0 %v324
  %337 = vmatprep.subr.bf16.mxu0 0
  %338 = vmatpush1.bf16.msra.mxu0 %v325
  %339 = vmatprep.subr.bf16.mxu0 0
  %340 = vmatpush1.bf16.msra.mxu0 %v326
  %341 = vmatprep.subr.bf16.mxu0 0
  %342 = vmatpush1.bf16.msra.mxu0 %v327
  %343 = vmatprep.subr.bf16.mxu0 0
  %344 = vmatpush1.bf16.msra.mxu0 0
  %345 = vmatprep.subr.bf16.mxu0 0
  %346 = vmatpush1.bf16.msra.mxu0 0
  %347 = vmatprep.subr.bf16.mxu0 0
  %348 = vmatpush1.bf16.msra.mxu0 0
  %349 = vmatprep.subr.bf16.mxu0 0
  %350 = vmatpush1.bf16.msra.mxu0 0
  %351 = vmatprep.subr.bf16.mxu0 0
  %352 = vmatpush1.bf16.msra.mxu0 0
  %353 = vmatprep.subr.bf16.mxu0 0
  %354 = vmatpush1.bf16.msra.mxu0 0
  %355 = vmatprep.subr.bf16.mxu0 0
  %356 = vmatpush1.bf16.msra.mxu0 0
  %357 = vmatprep.subr.bf16.mxu0 0
  %358 = vmatpush1.bf16.msra.mxu0 0
  %359 = vmatprep.subr.bf16.mxu0 0
  %360 = vmatpush1.bf16.msra.mxu0 0
  %361 = vmatprep.subr.bf16.mxu0 0
  %362 = vmatpush1.bf16.msra.mxu0 0
  %363 = vmatprep.subr.bf16.mxu0 0
  %364 = vmatpush1.bf16.msra.mxu0 0
  %365 = vmatprep.subr.bf16.mxu0 0
  %366 = vmatpush1.bf16.msra.mxu0 0
  %367 = vmatprep.mubr.bf16.mxu0 0
  %368 = vmatmul.mubr.bf16.gmra.mrb[0].mxu0 %v333
  %v369 = vpop.f32.mrb[0].mxu0
  %v370 = vadd.f32 %v306, %v369
  %v371 = vpop.f32.mrb[0].mxu0
  %v372 = vpop.f32.mrb[0].mxu0
  %v373 = vadd.f32 %v306, %v372
  %v374 = vpop.f32.mrb[0].mxu0
  %375 = vdwg.mxu0
  %vm376 = vcmask 15360
  %377 = vst.msk [vmem:[%s11] sm:$0xff] %vm376, %v370
  %378 = vst.msk [vmem:[%s11 + $0x8] sm:$0xff] %vm376, %v373
  // Predicated region
  $region46: #{spformer_forward.7} parent=0 // pred_check
    _
  $region47: #{spformer_forward.7} parent=0 // pred_check_branch
    %380 = sbr.rel (0) target = $region49
  $region48: #{spformer_forward.7} parent=0 // pred_region
    _
  $region49: #{spformer_forward.7} parent=0 // pred_fallthru
    _
  // Predicated region
  $region50: #{spformer_forward.7} parent=0 // pred_check
    _
  $region51: #{spformer_forward.7} parent=0 // pred_check_branch
    %382 = sbr.rel (0) target = $region53
  $region52: #{spformer_forward.7} parent=0 // pred_region
    _
  $region53: #{spformer_forward.7} parent=0 // pred_fallthru
    _

</llo_original>
